<compile_context>
chip_gen: v6e
topology: v6e:2x2x1
jax: 0.10.0
libtpu: 0.0.40
codegen_flags: <defaults>
</compile_context>

<pallas_src>
import functools

import jax
import jax.numpy as jnp
from jax.experimental import pallas as pl
from jax.experimental.pallas import tpu as pltpu

TIME_EMBEDDING = 32
CPAD = 128  # lane-dense channel padding


def _shift_prev(u):
    """Row l gets u[l-1]; row 0 gets zeros."""
    return jnp.concatenate([jnp.zeros_like(u[:1]), u[:-1]], axis=0)


def _shift_next(u):
    """Row l gets u[l+1]; last row gets zeros."""
    return jnp.concatenate([u[1:], jnp.zeros_like(u[:1])], axis=0)


def _bottom_layer_kernel(te_ref, x_ref,
                         wS_ref, bS_ref,
                         wR1t_ref, wR1h_ref, bR1_ref,
                         wR2_ref, bR2_ref,
                         wA_ref, bA_ref,
                         wE_ref, bE_ref,
                         out_ref, *, seq_len):
    rows = x_ref.shape[0]

    # Per-batch sequence position of every (flattened B*L) row.
    ridx = jax.lax.broadcasted_iota(jnp.int32, (rows, CPAD), 0)
    pos = ridx % seq_len
    first = pos == 0
    last = pos == seq_len - 1

    def pad_lanes(u):
        c = u.shape[1]
        if c == CPAD:
            return u
        return jnp.concatenate(
            [u, jnp.zeros((rows, CPAD - c), u.dtype)], axis=-1)

    def taps(u):
        """(rows, CPAD) -> (rows, 3*CPAD): [u[l-1] | u[l] | u[l+1]],
        zeroed at each sequence end (PyTorch 'same' padding)."""
        u_prev = jnp.where(first, 0.0, _shift_prev(u))
        u_next = jnp.where(last, 0.0, _shift_next(u))
        return jnp.concatenate([u_prev, u, u_next], axis=-1)

    def mm(u3, w_ref):
        w = w_ref[...]
        return jnp.dot(u3.astype(w.dtype), w,
                       preferred_element_type=jnp.float32)

    def conv3(u3, w_ref, b_ref):
        """One fused K=3*CPAD matmul == Conv1d(kernel_size=3, 'same')."""
        return mm(u3, w_ref) + b_ref[...]

    te = pad_lanes(te_ref[...])
    x = pad_lanes(x_ref[...])

    # ConvS: conv -> ReLU
    h = jnp.maximum(conv3(taps(x), wS_ref, bS_ref), 0.0)

    # ConvRes: conv(cat([timeEmbed, h])) -> ReLU -> conv
    # (concat expressed as two accumulating matmuls on the split weight)
    r = mm(taps(te), wR1t_ref) + mm(taps(h), wR1h_ref) + bR1_ref[...]
    r = jnp.maximum(r, 0.0)
    r = conv3(taps(r), wR2_ref, bR2_ref)

    # forward_1 = ReLU(h + ConvRes(...))
    f1 = jnp.maximum(h + r, 0.0)

    # attentionBlock: conv -> ReLU
    a = jnp.maximum(conv3(taps(f1), wA_ref, bA_ref), 0.0)

    # ConvE: conv -> ReLU on (forward_1 + attention)
    f2 = jnp.maximum(conv3(taps(f1 + a), wE_ref, bE_ref), 0.0)

    out_ref[...] = f2.astype(out_ref.dtype)


# ------------------------------ wrapper ---------------------------------------

def _pack_w(w, dtype):
    """(3, cin, cout) tap weights -> (3*CPAD, CPAD), zero padded / lane-dense.
    Tap k multiplies x[l + k - 1] (PyTorch cross-correlation)."""
    _, cin, cout = w.shape
    wp = jnp.zeros((3, CPAD, CPAD), jnp.float32)
    wp = wp.at[:, :cin, :cout].set(w.astype(jnp.float32))
    return wp.reshape(3 * CPAD, CPAD).astype(dtype)


def _pack_b(b):
    cout = b.shape[-1]
    return jnp.zeros((1, CPAD), jnp.float32).at[:, :cout].set(
        b.reshape(1, cout).astype(jnp.float32))


def _f32(a):
    return a if a.dtype == jnp.float32 else a.astype(jnp.float32)


def single_signal_bottom_layer_nlc(time_embed_blc, input_blc, params,
                                   *, num_blocks=1, use_bf16=False):
    """Channels-last entry point: (B, L, Ct), (B, L, Cin) -> (B, L, Cout).

    num_blocks: how many parallel grid blocks to split the batch into
      (1 = minimum per-step overhead; 2 feeds both v7x TensorCores).
    use_bf16: feed the MXU bf16 inputs (f32 accumulate/epilogue) on v6e/v7x.
    """
    te = _f32(time_embed_blc)
    x = _f32(input_blc)
    B, L, Cin = x.shape
    Ct = te.shape[-1]
    Cout = params["wS"].shape[-1]
    assert B % num_blocks == 0
    rows = B * L
    rows_blk = (B // num_blocks) * L

    mxu_dtype = jnp.bfloat16 if use_bf16 else jnp.float32

    # Split ConvRes[0] weight into its timeEmbed / h input halves.
    wR1 = params["wR1"]
    w_in = [
        _pack_w(params["wS"], mxu_dtype), _pack_b(params["bS"]),
        _pack_w(wR1[:, :Ct, :], mxu_dtype), _pack_w(wR1[:, Ct:, :], mxu_dtype),
        _pack_b(params["bR1"]),
        _pack_w(params["wR2"], mxu_dtype), _pack_b(params["bR2"]),
        _pack_w(params["wA"], mxu_dtype), _pack_b(params["bA"]),
        _pack_w(params["wE"], mxu_dtype), _pack_b(params["bE"]),
    ]

    def _full(shape):
        return pl.BlockSpec(shape, lambda i, _n=len(shape): (0,) * _n)

    flops = 6 * 2 * rows * (3 * CPAD) * CPAD
    bytes_accessed = 4 * rows * (Cin + Ct + CPAD) \
        + 6 * (3 * CPAD * CPAD * jnp.dtype(mxu_dtype).itemsize + 4 * CPAD)

    out_pad = pl.pallas_call(
        functools.partial(_bottom_layer_kernel, seq_len=L),
        out_shape=jax.ShapeDtypeStruct((rows, CPAD), jnp.float32),
        grid_spec=pltpu.PrefetchScalarGridSpec(
            num_scalar_prefetch=0,
            grid=(num_blocks,),
            in_specs=[
                pl.BlockSpec((rows_blk, Ct), lambda i: (i, 0)),
                pl.BlockSpec((rows_blk, Cin), lambda i: (i, 0)),
            ] + [_full(w.shape) for w in w_in],
            out_specs=pl.BlockSpec((rows_blk, CPAD), lambda i: (i, 0)),
        ),
        compiler_params=pltpu.CompilerParams(
            dimension_semantics=("parallel",)),
        cost_estimate=pl.CostEstimate(flops=flops, transcendentals=0,
                                      bytes_accessed=int(bytes_accessed)),
    )(te.reshape(rows, Ct), x.reshape(rows, Cin), *w_in)

    return out_pad[:, :Cout].reshape(B, L, Cout)


def single_signal_bottom_layer(time_embed_ncl, input_ncl, params,
                               *, num_blocks=1, use_bf16=False):
    """PyTorch-layout entry: (B, 32, L), (B, Cin, L) -> (B, Cout, L).

    In a full model, keep activations channels-last and call
    single_signal_bottom_layer_nlc directly to avoid per-layer transposes.
    """
    te = jnp.transpose(time_embed_ncl, (0, 2, 1))
    x = jnp.transpose(input_ncl, (0, 2, 1))
    out = single_signal_bottom_layer_nlc(te, x, params,
                                         num_blocks=num_blocks,
                                         use_bf16=use_bf16)
    return jnp.transpose(out, (0, 2, 1))


# ------------------------- pure-JAX reference (for checking) -----------------

def _conv1d_same_ref(x_blc, w, b):
    xp = jnp.pad(x_blc, ((0, 0), (1, 1), (0, 0)))
    y = (jnp.einsum("blc,cd->bld", xp[:, :-2], w[0])
         + jnp.einsum("blc,cd->bld", xp[:, 1:-1], w[1])
         + jnp.einsum("blc,cd->bld", xp[:, 2:], w[2]))
    return y + b


def _ref_forward(time_embed_ncl, input_ncl, p):
    te = jnp.transpose(time_embed_ncl, (0, 2, 1)).astype(jnp.float32)
    x = jnp.transpose(input_ncl, (0, 2, 1)).astype(jnp.float32)
    h = jax.nn.relu(_conv1d_same_ref(x, p["wS"], p["bS"]))
    cat = jnp.concatenate([te, h], axis=-1)
    r = jax.nn.relu(_conv1d_same_ref(cat, p["wR1"], p["bR1"]))
    r = _conv1d_same_ref(r, p["wR2"], p["bR2"])
    f1 = jax.nn.relu(h + r)
    a = jax.nn.relu(_conv1d_same_ref(f1, p["wA"], p["bA"]))
    f2 = jax.nn.relu(_conv1d_same_ref(f1 + a, p["wE"], p["bE"]))
    return jnp.transpose(f2, (0, 2, 1))


# ------------------------------ main ------------------------------------------

if __name__ == "__main__":
    key = jax.random.PRNGKey(0)
    B, L = 2, 16
    Cin, Cout, Ct = 64, 64, TIME_EMBEDDING

    keys = iter(jax.random.split(key, 16))

    # Weight layout: (3 taps, Cin, Cout); tap k == PyTorch weight[:, :, k].T
    def make_w(cin, cout):
        return 0.1 * jax.random.normal(next(keys), (3, cin, cout), jnp.float32)

    def make_b(cout):
        return 0.1 * jax.random.normal(next(keys), (1, cout), jnp.float32)

    params = {
        "wS": make_w(Cin, Cout),        "bS": make_b(Cout),
        "wR1": make_w(Cout + Ct, Cout), "bR1": make_b(Cout),
        "wR2": make_w(Cout, Cout),      "bR2": make_b(Cout),
        "wA": make_w(Cout, Cout),       "bA": make_b(Cout),
        "wE": make_w(Cout, Cout),       "bE": make_b(Cout),
    }

    time_embed = jax.random.normal(next(keys), (B, Ct, L), jnp.float32)  # NCL
    inp = jax.random.normal(next(keys), (B, Cin, L), jnp.float32)        # NCL

    out = jax.block_until_ready(
        single_signal_bottom_layer(time_embed, inp, params))
    ref = jax.block_until_ready(_ref_forward(time_embed, inp, params))

    assert out.shape == (B, Cout, L), out.shape
    err = float(jnp.max(jnp.abs(out - ref)))
    assert jnp.allclose(out, ref, rtol=1e-4, atol=1e-4), f"max abs err {err}"
    print("KERNEL_OK")
</pallas_src>

<mosaic_0001>
module attributes {stable_mosaic.version = 11 : i64} {
  func.func @_bottom_layer_kernel(%arg0: i32, %arg1: memref<32x32xf32, #tpu.memory_space<vmem>>, %arg2: memref<32x64xf32, #tpu.memory_space<vmem>>, %arg3: memref<384x128xf32, #tpu.memory_space<vmem>>, %arg4: memref<1x128xf32, #tpu.memory_space<vmem>>, %arg5: memref<384x128xf32, #tpu.memory_space<vmem>>, %arg6: memref<384x128xf32, #tpu.memory_space<vmem>>, %arg7: memref<1x128xf32, #tpu.memory_space<vmem>>, %arg8: memref<384x128xf32, #tpu.memory_space<vmem>>, %arg9: memref<1x128xf32, #tpu.memory_space<vmem>>, %arg10: memref<384x128xf32, #tpu.memory_space<vmem>>, %arg11: memref<1x128xf32, #tpu.memory_space<vmem>>, %arg12: memref<384x128xf32, #tpu.memory_space<vmem>>, %arg13: memref<1x128xf32, #tpu.memory_space<vmem>>, %arg14: memref<32x128xf32, #tpu.memory_space<vmem>>) attributes {dimension_semantics = [#tpu.dimension_semantics<parallel>], iteration_bounds = array<i64: 1>, scalar_prefetch = 0 : i64, scratch_operands = 0 : i64, tpu.core_type = #tpu.core_type<tc>, window_params = [{transform_indices = @transform_0, window_bounds = array<i64: 32, 32>}, {transform_indices = @transform_1, window_bounds = array<i64: 32, 64>}, {pipeline_mode = #tpu.pipeline_mode<synchronous>, transform_indices = @transform_2, window_bounds = array<i64: 384, 128>}, {pipeline_mode = #tpu.pipeline_mode<synchronous>, transform_indices = @transform_3, window_bounds = array<i64: 1, 128>}, {pipeline_mode = #tpu.pipeline_mode<synchronous>, transform_indices = @transform_4, window_bounds = array<i64: 384, 128>}, {pipeline_mode = #tpu.pipeline_mode<synchronous>, transform_indices = @transform_5, window_bounds = array<i64: 384, 128>}, {pipeline_mode = #tpu.pipeline_mode<synchronous>, transform_indices = @transform_6, window_bounds = array<i64: 1, 128>}, {pipeline_mode = #tpu.pipeline_mode<synchronous>, transform_indices = @transform_7, window_bounds = array<i64: 384, 128>}, {pipeline_mode = #tpu.pipeline_mode<synchronous>, transform_indices = @transform_8, window_bounds = array<i64: 1, 128>}, {pipeline_mode = #tpu.pipeline_mode<synchronous>, transform_indices = @transform_9, window_bounds = array<i64: 384, 128>}, {pipeline_mode = #tpu.pipeline_mode<synchronous>, transform_indices = @transform_10, window_bounds = array<i64: 1, 128>}, {pipeline_mode = #tpu.pipeline_mode<synchronous>, transform_indices = @transform_11, window_bounds = array<i64: 384, 128>}, {pipeline_mode = #tpu.pipeline_mode<synchronous>, transform_indices = @transform_12, window_bounds = array<i64: 1, 128>}, {transform_indices = @transform_13, window_bounds = array<i64: 32, 128>}]} {
    %0 = tpu.iota {dimensions = array<i32: 0>} : vector<32x128xi32>
    %c16_i32 = arith.constant 16 : i32
    %c0_i32 = arith.constant 0 : i32
    %1 = arith.cmpi eq, %c16_i32, %c0_i32 : i32
    %c1_i32 = arith.constant 1 : i32
    %2 = arith.select %1, %c1_i32, %c16_i32 : i32
    %3 = vector.broadcast %2 : i32 to vector<32x128xi32>
    %4 = arith.remsi %0, %3 : vector<32x128xi32>
    %c0_i32_0 = arith.constant 0 : i32
    %5 = vector.broadcast %c0_i32_0 : i32 to vector<32x128xi32>
    %6 = arith.cmpi ne, %4, %5 : vector<32x128xi32>
    %c0_i32_1 = arith.constant 0 : i32
    %7 = vector.broadcast %c0_i32_1 : i32 to vector<32x128xi32>
    %8 = arith.cmpi slt, %4, %7 : vector<32x128xi32>
    %c0_i32_2 = arith.constant 0 : i32
    %9 = arith.cmpi slt, %2, %c0_i32_2 : i32
    %10 = vector.broadcast %9 : i1 to vector<32x128xi1>
    %11 = vector.broadcast %10 : vector<32x128xi1> to vector<32x128xi1>
    %12 = arith.xori %8, %11 : vector<32x128xi1>
    %13 = arith.andi %12, %6 : vector<32x128xi1>
    %14 = vector.broadcast %2 : i32 to vector<32x128xi32>
    %15 = arith.addi %4, %14 : vector<32x128xi32>
    %16 = arith.select %13, %15, %4 : vector<32x128xi1>, vector<32x128xi32>
    %c0_i32_3 = arith.constant 0 : i32
    %17 = vector.broadcast %c0_i32_3 : i32 to vector<32x128xi32>
    %18 = arith.cmpi eq, %16, %17 : vector<32x128xi32>
    %c15_i32 = arith.constant 15 : i32
    %19 = vector.broadcast %c15_i32 : i32 to vector<32x128xi32>
    %20 = arith.cmpi eq, %16, %19 : vector<32x128xi32>
    %c0 = arith.constant 0 : index
    %c0_4 = arith.constant 0 : index
    %21 = vector.load %arg1[%c0, %c0_4] : memref<32x32xf32, #tpu.memory_space<vmem>>, vector<32x32xf32>
    %cst = arith.constant 0.000000e+00 : f32
    %22 = vector.broadcast %cst : f32 to vector<32x96xf32>
    %23 = tpu.concatenate %21, %22 in 1 : vector<32x32xf32>, vector<32x96xf32> -> vector<32x128xf32>
    %c0_5 = arith.constant 0 : index
    %c0_6 = arith.constant 0 : index
    %24 = vector.load %arg2[%c0_5, %c0_6] : memref<32x64xf32, #tpu.memory_space<vmem>>, vector<32x64xf32>
    %cst_7 = arith.constant 0.000000e+00 : f32
    %25 = vector.broadcast %cst_7 : f32 to vector<32x64xf32>
    %26 = tpu.concatenate %24, %25 in 1 : vector<32x64xf32>, vector<32x64xf32> -> vector<32x128xf32>
    %cst_8 = arith.constant 0.000000e+00 : f32
    %27 = vector.broadcast %cst_8 : f32 to vector<1x128xf32>
    %28 = vector.extract_strided_slice %26 {offsets = [0, 0], sizes = [31, 128], strides = [1, 1]} : vector<32x128xf32> to vector<31x128xf32>
    %29 = tpu.concatenate %27, %28 in 0 : vector<1x128xf32>, vector<31x128xf32> -> vector<32x128xf32>
    %cst_9 = arith.constant 0.000000e+00 : f32
    %30 = vector.broadcast %cst_9 : f32 to vector<32x128xf32>
    %31 = arith.select %18, %30, %29 : vector<32x128xi1>, vector<32x128xf32>
    %32 = vector.extract_strided_slice %26 {offsets = [1, 0], sizes = [31, 128], strides = [1, 1]} : vector<32x128xf32> to vector<31x128xf32>
    %cst_10 = arith.constant 0.000000e+00 : f32
    %33 = vector.broadcast %cst_10 : f32 to vector<1x128xf32>
    %34 = tpu.concatenate %32, %33 in 0 : vector<31x128xf32>, vector<1x128xf32> -> vector<32x128xf32>
    %cst_11 = arith.constant 0.000000e+00 : f32
    %35 = vector.broadcast %cst_11 : f32 to vector<32x128xf32>
    %36 = arith.select %20, %35, %34 : vector<32x128xi1>, vector<32x128xf32>
    %37 = tpu.concatenate %31, %26, %36 in 1 : vector<32x128xf32>, vector<32x128xf32>, vector<32x128xf32> -> vector<32x384xf32>
    %c0_12 = arith.constant 0 : index
    %c0_13 = arith.constant 0 : index
    %38 = vector.load %arg3[%c0_12, %c0_13] : memref<384x128xf32, #tpu.memory_space<vmem>>, vector<384x128xf32>
    %cst_14 = arith.constant dense<0.000000e+00> : vector<32x128xf32>
    %39 = tpu.matmul %37, %38, %cst_14 {dimension_numbers = #tpu.dot_dimension_numbers<[1], [0], [0], [1], [0, 0, 1, 1], [], []>} : vector<32x384xf32>, vector<384x128xf32>, vector<32x128xf32> -> vector<32x128xf32>
    %c0_15 = arith.constant 0 : index
    %c0_16 = arith.constant 0 : index
    %40 = vector.load %arg4[%c0_15, %c0_16] : memref<1x128xf32, #tpu.memory_space<vmem>>, vector<1x128xf32>
    %41 = vector.broadcast %40 : vector<1x128xf32> to vector<32x128xf32>
    %42 = arith.addf %39, %41 : vector<32x128xf32>
    %cst_17 = arith.constant 0.000000e+00 : f32
    %43 = vector.broadcast %cst_17 : f32 to vector<32x128xf32>
    %44 = arith.maximumf %42, %43 : vector<32x128xf32>
    %cst_18 = arith.constant 0.000000e+00 : f32
    %45 = vector.broadcast %cst_18 : f32 to vector<1x128xf32>
    %46 = vector.extract_strided_slice %23 {offsets = [0, 0], sizes = [31, 128], strides = [1, 1]} : vector<32x128xf32> to vector<31x128xf32>
    %47 = tpu.concatenate %45, %46 in 0 : vector<1x128xf32>, vector<31x128xf32> -> vector<32x128xf32>
    %cst_19 = arith.constant 0.000000e+00 : f32
    %48 = vector.broadcast %cst_19 : f32 to vector<32x128xf32>
    %49 = arith.select %18, %48, %47 : vector<32x128xi1>, vector<32x128xf32>
    %50 = vector.extract_strided_slice %23 {offsets = [1, 0], sizes = [31, 128], strides = [1, 1]} : vector<32x128xf32> to vector<31x128xf32>
    %cst_20 = arith.constant 0.000000e+00 : f32
    %51 = vector.broadcast %cst_20 : f32 to vector<1x128xf32>
    %52 = tpu.concatenate %50, %51 in 0 : vector<31x128xf32>, vector<1x128xf32> -> vector<32x128xf32>
    %cst_21 = arith.constant 0.000000e+00 : f32
    %53 = vector.broadcast %cst_21 : f32 to vector<32x128xf32>
    %54 = arith.select %20, %53, %52 : vector<32x128xi1>, vector<32x128xf32>
    %55 = tpu.concatenate %49, %23, %54 in 1 : vector<32x128xf32>, vector<32x128xf32>, vector<32x128xf32> -> vector<32x384xf32>
    %c0_22 = arith.constant 0 : index
    %c0_23 = arith.constant 0 : index
    %56 = vector.load %arg5[%c0_22, %c0_23] : memref<384x128xf32, #tpu.memory_space<vmem>>, vector<384x128xf32>
    %cst_24 = arith.constant dense<0.000000e+00> : vector<32x128xf32>
    %57 = tpu.matmul %55, %56, %cst_24 {dimension_numbers = #tpu.dot_dimension_numbers<[1], [0], [0], [1], [0, 0, 1, 1], [], []>} : vector<32x384xf32>, vector<384x128xf32>, vector<32x128xf32> -> vector<32x128xf32>
    %cst_25 = arith.constant 0.000000e+00 : f32
    %58 = vector.broadcast %cst_25 : f32 to vector<1x128xf32>
    %59 = vector.extract_strided_slice %44 {offsets = [0, 0], sizes = [31, 128], strides = [1, 1]} : vector<32x128xf32> to vector<31x128xf32>
    %60 = tpu.concatenate %58, %59 in 0 : vector<1x128xf32>, vector<31x128xf32> -> vector<32x128xf32>
    %cst_26 = arith.constant 0.000000e+00 : f32
    %61 = vector.broadcast %cst_26 : f32 to vector<32x128xf32>
    %62 = arith.select %18, %61, %60 : vector<32x128xi1>, vector<32x128xf32>
    %63 = vector.extract_strided_slice %44 {offsets = [1, 0], sizes = [31, 128], strides = [1, 1]} : vector<32x128xf32> to vector<31x128xf32>
    %cst_27 = arith.constant 0.000000e+00 : f32
    %64 = vector.broadcast %cst_27 : f32 to vector<1x128xf32>
    %65 = tpu.concatenate %63, %64 in 0 : vector<31x128xf32>, vector<1x128xf32> -> vector<32x128xf32>
    %cst_28 = arith.constant 0.000000e+00 : f32
    %66 = vector.broadcast %cst_28 : f32 to vector<32x128xf32>
    %67 = arith.select %20, %66, %65 : vector<32x128xi1>, vector<32x128xf32>
    %68 = tpu.concatenate %62, %44, %67 in 1 : vector<32x128xf32>, vector<32x128xf32>, vector<32x128xf32> -> vector<32x384xf32>
    %c0_29 = arith.constant 0 : index
    %c0_30 = arith.constant 0 : index
    %69 = vector.load %arg6[%c0_29, %c0_30] : memref<384x128xf32, #tpu.memory_space<vmem>>, vector<384x128xf32>
    %cst_31 = arith.constant dense<0.000000e+00> : vector<32x128xf32>
    %70 = tpu.matmul %68, %69, %cst_31 {dimension_numbers = #tpu.dot_dimension_numbers<[1], [0], [0], [1], [0, 0, 1, 1], [], []>} : vector<32x384xf32>, vector<384x128xf32>, vector<32x128xf32> -> vector<32x128xf32>
    %71 = arith.addf %57, %70 : vector<32x128xf32>
    %c0_32 = arith.constant 0 : index
    %c0_33 = arith.constant 0 : index
    %72 = vector.load %arg7[%c0_32, %c0_33] : memref<1x128xf32, #tpu.memory_space<vmem>>, vector<1x128xf32>
    %73 = vector.broadcast %72 : vector<1x128xf32> to vector<32x128xf32>
    %74 = arith.addf %71, %73 : vector<32x128xf32>
    %cst_34 = arith.constant 0.000000e+00 : f32
    %75 = vector.broadcast %cst_34 : f32 to vector<32x128xf32>
    %76 = arith.maximumf %74, %75 : vector<32x128xf32>
    %cst_35 = arith.constant 0.000000e+00 : f32
    %77 = vector.broadcast %cst_35 : f32 to vector<1x128xf32>
    %78 = vector.extract_strided_slice %76 {offsets = [0, 0], sizes = [31, 128], strides = [1, 1]} : vector<32x128xf32> to vector<31x128xf32>
    %79 = tpu.concatenate %77, %78 in 0 : vector<1x128xf32>, vector<31x128xf32> -> vector<32x128xf32>
    %cst_36 = arith.constant 0.000000e+00 : f32
    %80 = vector.broadcast %cst_36 : f32 to vector<32x128xf32>
    %81 = arith.select %18, %80, %79 : vector<32x128xi1>, vector<32x128xf32>
    %82 = vector.extract_strided_slice %76 {offsets = [1, 0], sizes = [31, 128], strides = [1, 1]} : vector<32x128xf32> to vector<31x128xf32>
    %cst_37 = arith.constant 0.000000e+00 : f32
    %83 = vector.broadcast %cst_37 : f32 to vector<1x128xf32>
    %84 = tpu.concatenate %82, %83 in 0 : vector<31x128xf32>, vector<1x128xf32> -> vector<32x128xf32>
    %cst_38 = arith.constant 0.000000e+00 : f32
    %85 = vector.broadcast %cst_38 : f32 to vector<32x128xf32>
    %86 = arith.select %20, %85, %84 : vector<32x128xi1>, vector<32x128xf32>
    %87 = tpu.concatenate %81, %76, %86 in 1 : vector<32x128xf32>, vector<32x128xf32>, vector<32x128xf32> -> vector<32x384xf32>
    %c0_39 = arith.constant 0 : index
    %c0_40 = arith.constant 0 : index
    %88 = vector.load %arg8[%c0_39, %c0_40] : memref<384x128xf32, #tpu.memory_space<vmem>>, vector<384x128xf32>
    %cst_41 = arith.constant dense<0.000000e+00> : vector<32x128xf32>
    %89 = tpu.matmul %87, %88, %cst_41 {dimension_numbers = #tpu.dot_dimension_numbers<[1], [0], [0], [1], [0, 0, 1, 1], [], []>} : vector<32x384xf32>, vector<384x128xf32>, vector<32x128xf32> -> vector<32x128xf32>
    %c0_42 = arith.constant 0 : index
    %c0_43 = arith.constant 0 : index
    %90 = vector.load %arg9[%c0_42, %c0_43] : memref<1x128xf32, #tpu.memory_space<vmem>>, vector<1x128xf32>
    %91 = vector.broadcast %90 : vector<1x128xf32> to vector<32x128xf32>
    %92 = arith.addf %89, %91 : vector<32x128xf32>
    %93 = arith.addf %44, %92 : vector<32x128xf32>
    %cst_44 = arith.constant 0.000000e+00 : f32
    %94 = vector.broadcast %cst_44 : f32 to vector<32x128xf32>
    %95 = arith.maximumf %93, %94 : vector<32x128xf32>
    %cst_45 = arith.constant 0.000000e+00 : f32
    %96 = vector.broadcast %cst_45 : f32 to vector<1x128xf32>
    %97 = vector.extract_strided_slice %95 {offsets = [0, 0], sizes = [31, 128], strides = [1, 1]} : vector<32x128xf32> to vector<31x128xf32>
    %98 = tpu.concatenate %96, %97 in 0 : vector<1x128xf32>, vector<31x128xf32> -> vector<32x128xf32>
    %cst_46 = arith.constant 0.000000e+00 : f32
    %99 = vector.broadcast %cst_46 : f32 to vector<32x128xf32>
    %100 = arith.select %18, %99, %98 : vector<32x128xi1>, vector<32x128xf32>
    %101 = vector.extract_strided_slice %95 {offsets = [1, 0], sizes = [31, 128], strides = [1, 1]} : vector<32x128xf32> to vector<31x128xf32>
    %cst_47 = arith.constant 0.000000e+00 : f32
    %102 = vector.broadcast %cst_47 : f32 to vector<1x128xf32>
    %103 = tpu.concatenate %101, %102 in 0 : vector<31x128xf32>, vector<1x128xf32> -> vector<32x128xf32>
    %cst_48 = arith.constant 0.000000e+00 : f32
    %104 = vector.broadcast %cst_48 : f32 to vector<32x128xf32>
    %105 = arith.select %20, %104, %103 : vector<32x128xi1>, vector<32x128xf32>
    %106 = tpu.concatenate %100, %95, %105 in 1 : vector<32x128xf32>, vector<32x128xf32>, vector<32x128xf32> -> vector<32x384xf32>
    %c0_49 = arith.constant 0 : index
    %c0_50 = arith.constant 0 : index
    %107 = vector.load %arg10[%c0_49, %c0_50] : memref<384x128xf32, #tpu.memory_space<vmem>>, vector<384x128xf32>
    %cst_51 = arith.constant dense<0.000000e+00> : vector<32x128xf32>
    %108 = tpu.matmul %106, %107, %cst_51 {dimension_numbers = #tpu.dot_dimension_numbers<[1], [0], [0], [1], [0, 0, 1, 1], [], []>} : vector<32x384xf32>, vector<384x128xf32>, vector<32x128xf32> -> vector<32x128xf32>
    %c0_52 = arith.constant 0 : index
    %c0_53 = arith.constant 0 : index
    %109 = vector.load %arg11[%c0_52, %c0_53] : memref<1x128xf32, #tpu.memory_space<vmem>>, vector<1x128xf32>
    %110 = vector.broadcast %109 : vector<1x128xf32> to vector<32x128xf32>
    %111 = arith.addf %108, %110 : vector<32x128xf32>
    %cst_54 = arith.constant 0.000000e+00 : f32
    %112 = vector.broadcast %cst_54 : f32 to vector<32x128xf32>
    %113 = arith.maximumf %111, %112 : vector<32x128xf32>
    %114 = arith.addf %95, %113 : vector<32x128xf32>
    %cst_55 = arith.constant 0.000000e+00 : f32
    %115 = vector.broadcast %cst_55 : f32 to vector<1x128xf32>
    %116 = vector.extract_strided_slice %114 {offsets = [0, 0], sizes = [31, 128], strides = [1, 1]} : vector<32x128xf32> to vector<31x128xf32>
    %117 = tpu.concatenate %115, %116 in 0 : vector<1x128xf32>, vector<31x128xf32> -> vector<32x128xf32>
    %cst_56 = arith.constant 0.000000e+00 : f32
    %118 = vector.broadcast %cst_56 : f32 to vector<32x128xf32>
    %119 = arith.select %18, %118, %117 : vector<32x128xi1>, vector<32x128xf32>
    %120 = vector.extract_strided_slice %114 {offsets = [1, 0], sizes = [31, 128], strides = [1, 1]} : vector<32x128xf32> to vector<31x128xf32>
    %cst_57 = arith.constant 0.000000e+00 : f32
    %121 = vector.broadcast %cst_57 : f32 to vector<1x128xf32>
    %122 = tpu.concatenate %120, %121 in 0 : vector<31x128xf32>, vector<1x128xf32> -> vector<32x128xf32>
    %cst_58 = arith.constant 0.000000e+00 : f32
    %123 = vector.broadcast %cst_58 : f32 to vector<32x128xf32>
    %124 = arith.select %20, %123, %122 : vector<32x128xi1>, vector<32x128xf32>
    %125 = tpu.concatenate %119, %114, %124 in 1 : vector<32x128xf32>, vector<32x128xf32>, vector<32x128xf32> -> vector<32x384xf32>
    %c0_59 = arith.constant 0 : index
    %c0_60 = arith.constant 0 : index
    %126 = vector.load %arg12[%c0_59, %c0_60] : memref<384x128xf32, #tpu.memory_space<vmem>>, vector<384x128xf32>
    %cst_61 = arith.constant dense<0.000000e+00> : vector<32x128xf32>
    %127 = tpu.matmul %125, %126, %cst_61 {dimension_numbers = #tpu.dot_dimension_numbers<[1], [0], [0], [1], [0, 0, 1, 1], [], []>} : vector<32x384xf32>, vector<384x128xf32>, vector<32x128xf32> -> vector<32x128xf32>
    %c0_62 = arith.constant 0 : index
    %c0_63 = arith.constant 0 : index
    %128 = vector.load %arg13[%c0_62, %c0_63] : memref<1x128xf32, #tpu.memory_space<vmem>>, vector<1x128xf32>
    %129 = vector.broadcast %128 : vector<1x128xf32> to vector<32x128xf32>
    %130 = arith.addf %127, %129 : vector<32x128xf32>
    %cst_64 = arith.constant 0.000000e+00 : f32
    %131 = vector.broadcast %cst_64 : f32 to vector<32x128xf32>
    %132 = arith.maximumf %130, %131 : vector<32x128xf32>
    %c0_65 = arith.constant 0 : index
    %c0_66 = arith.constant 0 : index
    %133 = vector.load %arg14[%c0_65, %c0_66] : memref<32x128xf32, #tpu.memory_space<vmem>>, vector<32x128xf32>
    tpu.vector_store %arg14[%c0_65, %c0_66], %132 {strides = array<i32>} : memref<32x128xf32, #tpu.memory_space<vmem>>, vector<32x128xf32>,
    return
  }
  func.func @transform_0(%arg0: i32) -> (i32, i32) {
    %c0_i32 = arith.constant 0 : i32
    %c0_i32_0 = arith.constant 0 : i32
    return %arg0, %c0_i32 : i32, i32
  }
  func.func @transform_1(%arg0: i32) -> (i32, i32) {
    %c0_i32 = arith.constant 0 : i32
    %c0_i32_0 = arith.constant 0 : i32
    return %arg0, %c0_i32 : i32, i32
  }
  func.func @transform_2(%arg0: i32) -> (i32, i32) {
    %c0_i32 = arith.constant 0 : i32
    %c0_i32_0 = arith.constant 0 : i32
    %c0_i32_1 = arith.constant 0 : i32
    return %c0_i32, %c0_i32_0 : i32, i32
  }
  func.func @transform_3(%arg0: i32) -> (i32, i32) {
    %c0_i32 = arith.constant 0 : i32
    %c0_i32_0 = arith.constant 0 : i32
    %c0_i32_1 = arith.constant 0 : i32
    return %c0_i32, %c0_i32_0 : i32, i32
  }
  func.func @transform_4(%arg0: i32) -> (i32, i32) {
    %c0_i32 = arith.constant 0 : i32
    %c0_i32_0 = arith.constant 0 : i32
    %c0_i32_1 = arith.constant 0 : i32
    return %c0_i32, %c0_i32_0 : i32, i32
  }
  func.func @transform_5(%arg0: i32) -> (i32, i32) {
    %c0_i32 = arith.constant 0 : i32
    %c0_i32_0 = arith.constant 0 : i32
    %c0_i32_1 = arith.constant 0 : i32
    return %c0_i32, %c0_i32_0 : i32, i32
  }
  func.func @transform_6(%arg0: i32) -> (i32, i32) {
    %c0_i32 = arith.constant 0 : i32
    %c0_i32_0 = arith.constant 0 : i32
    %c0_i32_1 = arith.constant 0 : i32
    return %c0_i32, %c0_i32_0 : i32, i32
  }
  func.func @transform_7(%arg0: i32) -> (i32, i32) {
    %c0_i32 = arith.constant 0 : i32
    %c0_i32_0 = arith.constant 0 : i32
    %c0_i32_1 = arith.constant 0 : i32
    return %c0_i32, %c0_i32_0 : i32, i32
  }
  func.func @transform_8(%arg0: i32) -> (i32, i32) {
    %c0_i32 = arith.constant 0 : i32
    %c0_i32_0 = arith.constant 0 : i32
    %c0_i32_1 = arith.constant 0 : i32
    return %c0_i32, %c0_i32_0 : i32, i32
  }
  func.func @transform_9(%arg0: i32) -> (i32, i32) {
    %c0_i32 = arith.constant 0 : i32
    %c0_i32_0 = arith.constant 0 : i32
    %c0_i32_1 = arith.constant 0 : i32
    return %c0_i32, %c0_i32_0 : i32, i32
  }
  func.func @transform_10(%arg0: i32) -> (i32, i32) {
    %c0_i32 = arith.constant 0 : i32
    %c0_i32_0 = arith.constant 0 : i32
    %c0_i32_1 = arith.constant 0 : i32
    return %c0_i32, %c0_i32_0 : i32, i32
  }
  func.func @transform_11(%arg0: i32) -> (i32, i32) {
    %c0_i32 = arith.constant 0 : i32
    %c0_i32_0 = arith.constant 0 : i32
    %c0_i32_1 = arith.constant 0 : i32
    return %c0_i32, %c0_i32_0 : i32, i32
  }
  func.func @transform_12(%arg0: i32) -> (i32, i32) {
    %c0_i32 = arith.constant 0 : i32
    %c0_i32_0 = arith.constant 0 : i32
    %c0_i32_1 = arith.constant 0 : i32
    return %c0_i32, %c0_i32_0 : i32, i32
  }
  func.func @transform_13(%arg0: i32) -> (i32, i32) {
    %c0_i32 = arith.constant 0 : i32
    %c0_i32_0 = arith.constant 0 : i32
    return %arg0, %c0_i32 : i32, i32
  }
}

</mosaic_0001>

<llo_original>
// kernel: tpu_custom_call.1
$region0: #{tpu_custom_call.1}
  #allocation0 [shape = 'u32[]', space=smem, size = 0x4, offset = 0x4, fixed_abs, tag = 'smem constant byte address 0x4 - core index']
  #allocation1 [shape = 'u32[144,128]{1,0:T(1,128)}', space=vmem, size = 0x12000, scoped, tag = 'internal scratch']
  %s0 = inlined_call_operand.hbm [shape: f32[32,32], index: 0, kind: input, shape index: {}]
  %s1 = inlined_call_operand.hbm [shape: f32[32,64], index: 1, kind: input, shape index: {}]
  %s2 = inlined_call_operand.hbm [shape: f32[384,128], index: 2, kind: input, shape index: {}]
  %s3 = inlined_call_operand.vmem [shape: f32[1,128], index: 3, kind: input, shape index: {}]
  %s4 = inlined_call_operand.hbm [shape: f32[384,128], index: 4, kind: input, shape index: {}]
  %s5 = inlined_call_operand.hbm [shape: f32[384,128], index: 5, kind: input, shape index: {}]
  %s6 = inlined_call_operand.vmem [shape: f32[1,128], index: 6, kind: input, shape index: {}]
  %s7 = inlined_call_operand.hbm [shape: f32[384,128], index: 7, kind: input, shape index: {}]
  %s8 = inlined_call_operand.vmem [shape: f32[1,128], index: 8, kind: input, shape index: {}]
  %s9 = inlined_call_operand.hbm [shape: f32[384,128], index: 9, kind: input, shape index: {}]
  %s10 = inlined_call_operand.vmem [shape: f32[1,128], index: 10, kind: input, shape index: {}]
  %s11 = inlined_call_operand.hbm [shape: f32[384,128], index: 11, kind: input, shape index: {}]
  %s12 = inlined_call_operand.vmem [shape: f32[1,128], index: 12, kind: input, shape index: {}]
  %s13 = inlined_call_operand.hbm [shape: f32[32,128], index: 13, kind: output, shape index: {}]
  %s14 = sld [smem:[#allocation0]]
  $region94: #{tpu_custom_call.1} parent=0
    _
  %s16 = ssub.s32 1, %s14
  %s17 = scalar_select 0, %s16, %s14
  $region1: #{tpu_custom_call.1} parent=0
    #allocation2 [shape = 'u8[16384]{0}', space=vmem, size = 0x4000, scoped, tag = 'input window, operand 0, single buffered']
    #allocation3 [shape = 's32[1]{0}', space=sflag, size = 0x4, scoped, tag = 'scoped memory for tpu_custom_call.1']
    #allocation4 [shape = 's32[1]{0}', space=sflag, size = 0x4, scoped, tag = 'scoped memory for tpu_custom_call.1']
    #allocation5 [shape = 'u8[16384]{0}', space=vmem, size = 0x4000, scoped, tag = 'input window, operand 1, single buffered']
    #allocation6 [shape = 's32[1]{0}', space=sflag, size = 0x4, scoped, tag = 'scoped memory for tpu_custom_call.1']
    #allocation7 [shape = 'u8[196608]{0}', space=vmem, size = 0x30000, scoped, tag = 'input window, operand 2, single buffered']
    #allocation8 [shape = 'u8[196608]{0}', space=vmem, size = 0x30000, scoped, tag = 'input window, operand 4, single buffered']
    #allocation9 [shape = 's32[1]{0}', space=sflag, size = 0x4, scoped, tag = 'scoped memory for tpu_custom_call.1']
    #allocation10 [shape = 'u8[196608]{0}', space=vmem, size = 0x30000, scoped, tag = 'input window, operand 5, single buffered']
    #allocation11 [shape = 'u8[196608]{0}', space=vmem, size = 0x30000, scoped, tag = 'input window, operand 7, single buffered']
    #allocation12 [shape = 's32[1]{0}', space=sflag, size = 0x4, scoped, tag = 'scoped memory for tpu_custom_call.1']
    #allocation13 [shape = 'u8[196608]{0}', space=vmem, size = 0x30000, scoped, tag = 'input window, operand 9, single buffered']
    #allocation14 [shape = 'u8[196608]{0}', space=vmem, size = 0x30000, scoped, tag = 'input window, operand 11, single buffered']
    #allocation15 [shape = 's32[1]{0}', space=sflag, size = 0x4, scoped, tag = 'scoped memory for tpu_custom_call.1']
    #allocation16 [shape = 'u8[16384]{0}', space=vmem, size = 0x4000, scoped, tag = 'output window, operand 0, single buffered']
    %18 = vsyncpa [#allocation3], 0
    %19 = vsyncpa [#allocation6], 0
    %20 = vsyncpa [#allocation9], 0
    %21 = vsyncpa [#allocation12], 0
    %22 = vsyncpa [#allocation15], 0
    %23 = vsyncpa [#allocation4], 0
    // Predicated region
    $region2: #{tpu_custom_call.1} parent=1 // pred_check
      _
    $region3: #{tpu_custom_call.1} parent=1 // pred_check_branch
      %25 = sbr.rel (0) target = $region5
    $region4: #{tpu_custom_call.1} parent=1 // pred_region
      %s27 = ssub.s32 512, 512
      %28 = vsyncadd [#allocation3], %s27
      %s29 = sshll.u32 [#allocation2], 4
      %s30 = int_to_ptr.vmem [resolvable:$true] %s29
      %35 = dma.hbm_to_vmem [thread:$0]  %s0, 512, %s30, [#allocation3], 128, 128, 8
    $region5: #{tpu_custom_call.1} parent=1 // pred_fallthru
      _
    // Predicated region
    $region6: #{tpu_custom_call.1} parent=1 // pred_check
      _
    $region7: #{tpu_custom_call.1} parent=1 // pred_check_branch
      %37 = sbr.rel (0) target = $region9
    $region8: #{tpu_custom_call.1} parent=1 // pred_region
      %s39 = ssub.s32 512, 512
      %40 = vsyncadd [#allocation6], %s39
      %s41 = sshll.u32 [#allocation5], 4
      %s42 = int_to_ptr.vmem [resolvable:$true] %s41
      %47 = dma.hbm_to_vmem [thread:$0]  %s1, 512, %s42, [#allocation6], 128, 128, 8
    $region9: #{tpu_custom_call.1} parent=1 // pred_fallthru
      _
    // Predicated region
    $region10: #{tpu_custom_call.1} parent=1 // pred_check
      _
    $region11: #{tpu_custom_call.1} parent=1 // pred_check_branch
      %49 = sbr.rel (0) target = $region13
    $region12: #{tpu_custom_call.1} parent=1 // pred_region
      %s51 = ssub.s32 6144, 6144
      %52 = vsyncadd [#allocation6], %s51
      %s53 = sshll.u32 [#allocation7], 4
      %s54 = int_to_ptr.vmem [resolvable:$true] %s53
      %59 = dma.hbm_to_vmem [thread:$0]  %s2, 6144, %s54, [#allocation6], 128, 128, 8
    $region13: #{tpu_custom_call.1} parent=1 // pred_fallthru
      _
    // Predicated region
    $region14: #{tpu_custom_call.1} parent=1 // pred_check
      _
    $region15: #{tpu_custom_call.1} parent=1 // pred_check_branch
      %61 = sbr.rel (0) target = $region17
    $region16: #{tpu_custom_call.1} parent=1 // pred_region
      _
    $region17: #{tpu_custom_call.1} parent=1 // pred_fallthru
      _
    // Predicated region
    $region18: #{tpu_custom_call.1} parent=1 // pred_check
      _
    $region19: #{tpu_custom_call.1} parent=1 // pred_check_branch
      %63 = sbr.rel (0) target = $region21
    $region20: #{tpu_custom_call.1} parent=1 // pred_region
      %s65 = ssub.s32 6144, 6144
      %66 = vsyncadd [#allocation9], %s65
      %s67 = sshll.u32 [#allocation8], 4
      %s68 = int_to_ptr.vmem [resolvable:$true] %s67
      %73 = dma.hbm_to_vmem [thread:$0]  %s4, 6144, %s68, [#allocation9], 128, 128, 8
    $region21: #{tpu_custom_call.1} parent=1 // pred_fallthru
      _
    // Predicated region
    $region22: #{tpu_custom_call.1} parent=1 // pred_check
      _
    $region23: #{tpu_custom_call.1} parent=1 // pred_check_branch
      %75 = sbr.rel (0) target = $region25
    $region24: #{tpu_custom_call.1} parent=1 // pred_region
      %s77 = ssub.s32 6144, 6144
      %78 = vsyncadd [#allocation9], %s77
      %s79 = sshll.u32 [#allocation10], 4
      %s80 = int_to_ptr.vmem [resolvable:$true] %s79
      %85 = dma.hbm_to_vmem [thread:$0]  %s5, 6144, %s80, [#allocation9], 128, 128, 8
    $region25: #{tpu_custom_call.1} parent=1 // pred_fallthru
      _
    // Predicated region
    $region26: #{tpu_custom_call.1} parent=1 // pred_check
      _
    $region27: #{tpu_custom_call.1} parent=1 // pred_check_branch
      %87 = sbr.rel (0) target = $region29
    $region28: #{tpu_custom_call.1} parent=1 // pred_region
      _
    $region29: #{tpu_custom_call.1} parent=1 // pred_fallthru
      _
    // Predicated region
    $region30: #{tpu_custom_call.1} parent=1 // pred_check
      _
    $region31: #{tpu_custom_call.1} parent=1 // pred_check_branch
      %89 = sbr.rel (0) target = $region33
    $region32: #{tpu_custom_call.1} parent=1 // pred_region
      %s91 = ssub.s32 6144, 6144
      %92 = vsyncadd [#allocation12], %s91
      %s93 = sshll.u32 [#allocation11], 4
      %s94 = int_to_ptr.vmem [resolvable:$true] %s93
      %99 = dma.hbm_to_vmem [thread:$0]  %s7, 6144, %s94, [#allocation12], 128, 128, 8
    $region33: #{tpu_custom_call.1} parent=1 // pred_fallthru
      _
    // Predicated region
    $region34: #{tpu_custom_call.1} parent=1 // pred_check
      _
    $region35: #{tpu_custom_call.1} parent=1 // pred_check_branch
      %101 = sbr.rel (0) target = $region37
    $region36: #{tpu_custom_call.1} parent=1 // pred_region
      _
    $region37: #{tpu_custom_call.1} parent=1 // pred_fallthru
      _
    // Predicated region
    $region38: #{tpu_custom_call.1} parent=1 // pred_check
      _
    $region39: #{tpu_custom_call.1} parent=1 // pred_check_branch
      %103 = sbr.rel (0) target = $region41
    $region40: #{tpu_custom_call.1} parent=1 // pred_region
      %s105 = ssub.s32 6144, 6144
      %106 = vsyncadd [#allocation12], %s105
      %s107 = sshll.u32 [#allocation13], 4
      %s108 = int_to_ptr.vmem [resolvable:$true] %s107
      %113 = dma.hbm_to_vmem [thread:$0]  %s9, 6144, %s108, [#allocation12], 128, 128, 8
    $region41: #{tpu_custom_call.1} parent=1 // pred_fallthru
      _
    // Predicated region
    $region42: #{tpu_custom_call.1} parent=1 // pred_check
      _
    $region43: #{tpu_custom_call.1} parent=1 // pred_check_branch
      %115 = sbr.rel (0) target = $region45
    $region44: #{tpu_custom_call.1} parent=1 // pred_region
      _
    $region45: #{tpu_custom_call.1} parent=1 // pred_fallthru
      _
    // Predicated region
    $region46: #{tpu_custom_call.1} parent=1 // pred_check
      _
    $region47: #{tpu_custom_call.1} parent=1 // pred_check_branch
      %117 = sbr.rel (0) target = $region49
    $region48: #{tpu_custom_call.1} parent=1 // pred_region
      %s119 = ssub.s32 6144, 6144
      %120 = vsyncadd [#allocation15], %s119
      %s121 = sshll.u32 [#allocation14], 4
      %s122 = int_to_ptr.vmem [resolvable:$true] %s121
      %127 = dma.hbm_to_vmem [thread:$0]  %s11, 6144, %s122, [#allocation15], 128, 128, 8
    $region49: #{tpu_custom_call.1} parent=1 // pred_fallthru
      _
    // Predicated region
    $region50: #{tpu_custom_call.1} parent=1 // pred_check
      _
    $region51: #{tpu_custom_call.1} parent=1 // pred_check_branch
      %129 = sbr.rel (0) target = $region53
    $region52: #{tpu_custom_call.1} parent=1 // pred_region
      _
    $region53: #{tpu_custom_call.1} parent=1 // pred_fallthru
      _
    // Predicated region
    $region54: #{tpu_custom_call.1} parent=1 // pred_check
      _
    $region55: #{tpu_custom_call.1} parent=1 // pred_check_branch
      %131 = sbr.rel (0) target = $region57
    $region56: #{tpu_custom_call.1} parent=1 // pred_region
      %132 = dma.done [#allocation3], 512
    $region57: #{tpu_custom_call.1} parent=1 // pred_fallthru
      _
    // Predicated region
    $region58: #{tpu_custom_call.1} parent=1 // pred_check
      _
    $region59: #{tpu_custom_call.1} parent=1 // pred_check_branch
      %134 = sbr.rel (0) target = $region61
    $region60: #{tpu_custom_call.1} parent=1 // pred_region
      %135 = dma.done [#allocation6], 512
    $region61: #{tpu_custom_call.1} parent=1 // pred_fallthru
      _
    // Predicated region
    $region62: #{tpu_custom_call.1} parent=1 // pred_check
      _
    $region63: #{tpu_custom_call.1} parent=1 // pred_check_branch
      %137 = sbr.rel (0) target = $region65
    $region64: #{tpu_custom_call.1} parent=1 // pred_region
      %138 = dma.done [#allocation6], 6144
    $region65: #{tpu_custom_call.1} parent=1 // pred_fallthru
      _
    // Predicated region
    $region66: #{tpu_custom_call.1} parent=1 // pred_check
      _
    $region67: #{tpu_custom_call.1} parent=1 // pred_check_branch
      %140 = sbr.rel (0) target = $region69
    $region68: #{tpu_custom_call.1} parent=1 // pred_region
      %141 = dma.done [#allocation9], 6144
    $region69: #{tpu_custom_call.1} parent=1 // pred_fallthru
      _
    // Predicated region
    $region70: #{tpu_custom_call.1} parent=1 // pred_check
      _
    $region71: #{tpu_custom_call.1} parent=1 // pred_check_branch
      %143 = sbr.rel (0) target = $region73
    $region72: #{tpu_custom_call.1} parent=1 // pred_region
      %144 = dma.done [#allocation9], 6144
    $region73: #{tpu_custom_call.1} parent=1 // pred_fallthru
      _
    // Predicated region
    $region74: #{tpu_custom_call.1} parent=1 // pred_check
      _
    $region75: #{tpu_custom_call.1} parent=1 // pred_check_branch
      %146 = sbr.rel (0) target = $region77
    $region76: #{tpu_custom_call.1} parent=1 // pred_region
      %147 = dma.done [#allocation12], 6144
    $region77: #{tpu_custom_call.1} parent=1 // pred_fallthru
      _
    // Predicated region
    $region78: #{tpu_custom_call.1} parent=1 // pred_check
      _
    $region79: #{tpu_custom_call.1} parent=1 // pred_check_branch
      %149 = sbr.rel (0) target = $region81
    $region80: #{tpu_custom_call.1} parent=1 // pred_region
      %150 = dma.done [#allocation12], 6144
    $region81: #{tpu_custom_call.1} parent=1 // pred_fallthru
      _
    // Predicated region
    $region82: #{tpu_custom_call.1} parent=1 // pred_check
      _
    $region83: #{tpu_custom_call.1} parent=1 // pred_check_branch
      %152 = sbr.rel (0) target = $region85
    $region84: #{tpu_custom_call.1} parent=1 // pred_region
      %153 = dma.done [#allocation15], 6144
    $region85: #{tpu_custom_call.1} parent=1 // pred_fallthru
      _
    %v154 = vlaneseq
    %v155 = vshrl.u32 %v154, 7
    %v156 = vadd.s32 %v155, 8
    %v157 = vadd.s32 %v155, 16
    %v158 = vadd.s32 %v155, 24
    %vm159 = vcmp.lt.s32.totalorder %v155, 0
    %v160 = vsub.s32 0, %v155
    %v161 = vsel %vm159, %v160, %v155
    %v162 = vshrl.u32 %v161, 4
    %v163 = vand.u32 %v161, 15
    %v164 = vsub.s32 0, %v163
    %v165 = vsel %vm159, %v164, %v163
    %vm166 = vcmp.lt.s32.totalorder %v156, 0
    %v167 = vsub.s32 0, %v156
    %v168 = vsel %vm166, %v167, %v156
    %v169 = vshrl.u32 %v168, 4
    %v170 = vand.u32 %v168, 15
    %v171 = vsub.s32 0, %v170
    %v172 = vsel %vm166, %v171, %v170
    %vm173 = vcmp.lt.s32.totalorder %v157, 0
    %v174 = vsub.s32 0, %v157
    %v175 = vsel %vm173, %v174, %v157
    %v176 = vshrl.u32 %v175, 4
    %v177 = vand.u32 %v175, 15
    %v178 = vsub.s32 0, %v177
    %v179 = vsel %vm173, %v178, %v177
    %vm180 = vcmp.lt.s32.totalorder %v158, 0
    %v181 = vsub.s32 0, %v158
    %v182 = vsel %vm180, %v181, %v158
    %v183 = vshrl.u32 %v182, 4
    %v184 = vand.u32 %v182, 15
    %v185 = vsub.s32 0, %v184
    %v186 = vsel %vm180, %v185, %v184
    %vm187 = vcmp.ne.s32.totalorder %v165, 0
    %vm188 = vcmp.ne.s32.totalorder %v172, 0
    %vm189 = vcmp.ne.s32.totalorder %v179, 0
    %vm190 = vcmp.ne.s32.totalorder %v186, 0
    %vm191 = vcmp.lt.s32.totalorder %v165, 0
    %vm192 = vcmp.lt.s32.totalorder %v172, 0
    %vm193 = vcmp.lt.s32.totalorder %v179, 0
    %vm194 = vcmp.lt.s32.totalorder %v186, 0
    %vm195 = vmand %vm191, %vm187
    %vm196 = vmand %vm192, %vm188
    %vm197 = vmand %vm193, %vm189
    %vm198 = vmand %vm194, %vm190
    %v199 = vadd.s32 %v165, 16
    %v200 = vadd.s32 %v172, 16
    %v201 = vadd.s32 %v179, 16
    %v202 = vadd.s32 %v186, 16
    %v203 = vsel %vm195, %v199, %v165
    %v204 = vsel %vm196, %v200, %v172
    %v205 = vsel %vm197, %v201, %v179
    %v206 = vsel %vm198, %v202, %v186
    %vm207 = vcmp.eq.s32.totalorder %v203, 0
    %vm208 = vcmp.eq.s32.totalorder %v204, 0
    %vm209 = vcmp.eq.s32.totalorder %v205, 0
    %vm210 = vcmp.eq.s32.totalorder %v206, 0
    %vm211 = vcmp.eq.s32.totalorder %v203, 15
    %vm212 = vcmp.eq.s32.totalorder %v204, 15
    %vm213 = vcmp.eq.s32.totalorder %v205, 15
    %vm214 = vcmp.eq.s32.totalorder %v206, 15
    %v215 = vld [vmem:[#allocation2] sm:$0xff]
    %v216 = vld [vmem:[#allocation2 + $0x8] sm:$0xff]
    %v217 = vld [vmem:[#allocation2 + $0x10] sm:$0xff]
    %v218 = vld [vmem:[#allocation2 + $0x18] sm:$0xff]
    %vm219 = vcmask 261120
    %v220 = vsel %vm219, %v215, 0.0
    %v221 = vsel %vm219, %v216, 0.0
    %v222 = vsel %vm219, %v217, 0.0
    %v223 = vsel %vm219, %v218, 0.0
    %v224 = vld [vmem:[#allocation5] sm:$0xff]
    %v225 = vld [vmem:[#allocation5 + $0x8] sm:$0xff]
    %v226 = vld [vmem:[#allocation5 + $0x10] sm:$0xff]
    %v227 = vld [vmem:[#allocation5 + $0x18] sm:$0xff]
    %vm228 = vcmask 523264
    %v229 = vsel %vm228, %v224, 0.0
    %v230 = vsel %vm228, %v225, 0.0
    %v231 = vsel %vm228, %v226, 0.0
    %v232 = vsel %vm228, %v227, 0.0
    %vm237 = vcmask 1040384
    %v238 = vrot.slane %v229, 7
    %v239 = vrot.slane %v230, 7
    %v240 = vsel %vm237, %v238, %v239
    %v241 = vrot.slane %v231, 7
    %v242 = vsel %vm237, %v239, %v241
    %v243 = vrot.slane %v232, 7
    %v244 = vsel %vm237, %v241, %v243
    %v249 = vsel %vm237, 0.0, %v238
    %v250 = vsel %vm207, 0.0, %v249
    %v251 = vsel %vm208, 0.0, %v240
    %v252 = vsel %vm209, 0.0, %v242
    %v253 = vsel %vm210, 0.0, %v244
    %vm254 = vcmask 1046528
    %v255 = vrot.slane %v229, 1
    %v256 = vrot.slane %v230, 1
    %v257 = vsel %vm254, %v255, %v256
    %v258 = vrot.slane %v231, 1
    %v259 = vsel %vm254, %v256, %v258
    %v260 = vrot.slane %v232, 1
    %v261 = vsel %vm254, %v258, %v260
    %v266 = vsel %vm254, %v260, 0.0
    %v267 = vsel %vm211, 0.0, %v257
    %v268 = vsel %vm212, 0.0, %v259
    %v269 = vsel %vm213, 0.0, %v261
    %v270 = vsel %vm214, 0.0, %v266
    %v271 = vld [vmem:[#allocation7] sm:$0xff]
    %v272 = vld [vmem:[#allocation7 + $0x8] sm:$0xff]
    %v273 = vld [vmem:[#allocation7 + $0x10] sm:$0xff]
    %v274 = vld [vmem:[#allocation7 + $0x18] sm:$0xff]
    %v275 = vld [vmem:[#allocation7 + $0x20] sm:$0xff]
    %v276 = vld [vmem:[#allocation7 + $0x28] sm:$0xff]
    %v277 = vld [vmem:[#allocation7 + $0x30] sm:$0xff]
    %v278 = vld [vmem:[#allocation7 + $0x38] sm:$0xff]
    %v279 = vld [vmem:[#allocation7 + $0x40] sm:$0xff]
    %v280 = vld [vmem:[#allocation7 + $0x48] sm:$0xff]
    %v281 = vld [vmem:[#allocation7 + $0x50] sm:$0xff]
    %v282 = vld [vmem:[#allocation7 + $0x58] sm:$0xff]
    %v283 = vld [vmem:[#allocation7 + $0x60] sm:$0xff]
    %v284 = vld [vmem:[#allocation7 + $0x68] sm:$0xff]
    %v285 = vld [vmem:[#allocation7 + $0x70] sm:$0xff]
    %v286 = vld [vmem:[#allocation7 + $0x78] sm:$0xff]
    %v287 = vld [vmem:[#allocation7 + $0x80] sm:$0xff]
    %v288 = vld [vmem:[#allocation7 + $0x88] sm:$0xff]
    %v289 = vld [vmem:[#allocation7 + $0x90] sm:$0xff]
    %v290 = vld [vmem:[#allocation7 + $0x98] sm:$0xff]
    %v291 = vld [vmem:[#allocation7 + $0xa0] sm:$0xff]
    %v292 = vld [vmem:[#allocation7 + $0xa8] sm:$0xff]
    %v293 = vld [vmem:[#allocation7 + $0xb0] sm:$0xff]
    %v294 = vld [vmem:[#allocation7 + $0xb8] sm:$0xff]
    %v295 = vld [vmem:[#allocation7 + $0xc0] sm:$0xff]
    %v296 = vld [vmem:[#allocation7 + $0xc8] sm:$0xff]
    %v297 = vld [vmem:[#allocation7 + $0xd0] sm:$0xff]
    %v298 = vld [vmem:[#allocation7 + $0xd8] sm:$0xff]
    %v299 = vld [vmem:[#allocation7 + $0xe0] sm:$0xff]
    %v300 = vld [vmem:[#allocation7 + $0xe8] sm:$0xff]
    %v301 = vld [vmem:[#allocation7 + $0xf0] sm:$0xff]
    %v302 = vld [vmem:[#allocation7 + $0xf8] sm:$0xff]
    %v303 = vld [vmem:[#allocation7 + $0x100] sm:$0xff]
    %v304 = vld [vmem:[#allocation7 + $0x108] sm:$0xff]
    %v305 = vld [vmem:[#allocation7 + $0x110] sm:$0xff]
    %v306 = vld [vmem:[#allocation7 + $0x118] sm:$0xff]
    %v307 = vld [vmem:[#allocation7 + $0x120] sm:$0xff]
    %v308 = vld [vmem:[#allocation7 + $0x128] sm:$0xff]
    %v309 = vld [vmem:[#allocation7 + $0x130] sm:$0xff]
    %v310 = vld [vmem:[#allocation7 + $0x138] sm:$0xff]
    %v311 = vld [vmem:[#allocation7 + $0x140] sm:$0xff]
    %v312 = vld [vmem:[#allocation7 + $0x148] sm:$0xff]
    %v313 = vld [vmem:[#allocation7 + $0x150] sm:$0xff]
    %v314 = vld [vmem:[#allocation7 + $0x158] sm:$0xff]
    %v315 = vld [vmem:[#allocation7 + $0x160] sm:$0xff]
    %v316 = vld [vmem:[#allocation7 + $0x168] sm:$0xff]
    %v317 = vld [vmem:[#allocation7 + $0x170] sm:$0xff]
    %v318 = vld [vmem:[#allocation7 + $0x178] sm:$0xff]
    %v319 = vld [vmem:[%s3] sm:$0x1]
    %v321 = vlaneseq
    %v322 = vshrl.u32 %v321, 7
    %v323 = vsub.s32 0, %v322
    %v324 = vrot.slane %v319, %v323
    %326 = vmatprep.subr.mxu0 0.0
    %327 = vmatpush1.msra.mxu0 %v286
    %328 = vmatprep.subr.mxu0 0.0
    %329 = vmatpush1.msra.mxu0 %v285
    %330 = vmatprep.subr.mxu0 0.0
    %331 = vmatpush1.msra.mxu0 %v284
    %332 = vmatprep.subr.mxu0 0.0
    %333 = vmatpush1.msra.mxu0 %v283
    %334 = vmatprep.subr.mxu0 0.0
    %335 = vmatpush1.msra.mxu0 %v282
    %336 = vmatprep.subr.mxu0 0.0
    %337 = vmatpush1.msra.mxu0 %v281
    %338 = vmatprep.subr.mxu0 0.0
    %339 = vmatpush1.msra.mxu0 %v280
    %340 = vmatprep.subr.mxu0 0.0
    %341 = vmatpush1.msra.mxu0 %v279
    %342 = vmatprep.subr.mxu0 0.0
    %343 = vmatpush1.msra.mxu0 %v278
    %344 = vmatprep.subr.mxu0 0.0
    %345 = vmatpush1.msra.mxu0 %v277
    %346 = vmatprep.subr.mxu0 0.0
    %347 = vmatpush1.msra.mxu0 %v276
    %348 = vmatprep.subr.mxu0 0.0
    %349 = vmatpush1.msra.mxu0 %v275
    %350 = vmatprep.subr.mxu0 0.0
    %351 = vmatpush1.msra.mxu0 %v274
    %352 = vmatprep.subr.mxu0 0.0
    %353 = vmatpush1.msra.mxu0 %v273
    %354 = vmatprep.subr.mxu0 0.0
    %355 = vmatpush1.msra.mxu0 %v272
    %356 = vmatprep.subr.mxu0 0.0
    %357 = vmatpush1.msra.mxu0 %v271
    %358 = vmatprep.subr.mxu0 0.0
    %359 = vmatpush2.msra.mxu0 %v302
    %360 = vmatprep.subr.mxu0 0.0
    %361 = vmatpush2.msra.mxu0 %v301
    %362 = vmatprep.subr.mxu0 0.0
    %363 = vmatpush2.msra.mxu0 %v300
    %364 = vmatprep.subr.mxu0 0.0
    %365 = vmatpush2.msra.mxu0 %v299
    %366 = vmatprep.subr.mxu0 0.0
    %367 = vmatpush2.msra.mxu0 %v298
    %368 = vmatprep.subr.mxu0 0.0
    %369 = vmatpush2.msra.mxu0 %v297
    %370 = vmatprep.subr.mxu0 0.0
    %371 = vmatpush2.msra.mxu0 %v296
    %372 = vmatprep.subr.mxu0 0.0
    %373 = vmatpush2.msra.mxu0 %v295
    %374 = vmatprep.subr.mxu0 0.0
    %375 = vmatpush2.msra.mxu0 %v294
    %376 = vmatprep.subr.mxu0 0.0
    %377 = vmatpush2.msra.mxu0 %v293
    %378 = vmatprep.subr.mxu0 0.0
    %379 = vmatpush2.msra.mxu0 %v292
    %380 = vmatprep.subr.mxu0 0.0
    %381 = vmatpush2.msra.mxu0 %v291
    %382 = vmatprep.subr.mxu0 0.0
    %383 = vmatpush2.msra.mxu0 %v290
    %384 = vmatprep.subr.mxu0 0.0
    %385 = vmatpush2.msra.mxu0 %v289
    %386 = vmatprep.subr.mxu0 0.0
    %387 = vmatpush2.msra.mxu0 %v288
    %388 = vmatprep.subr.mxu0 0.0
    %389 = vmatpush2.msra.mxu0 %v287
    %390 = vmatprep.mubr.f32.mxu0 %v229
    %391 = vmatmul.mubr.f32.gmra.mxu0 %v250
    %v392 = vpop.f32.mrf.mxu0
    %v393 = vadd.f32 %v324, %v392
    %v394 = vpop.f32.mrf.mxu0
    %395 = vmatprep.mubr.f32.mxu0 %v230
    %396 = vmatmul.mubr.f32.gmra.mxu0 %v251
    %v397 = vpop.f32.mrf.mxu0
    %v398 = vadd.f32 %v324, %v397
    %v399 = vpop.f32.mrf.mxu0
    %400 = vmatprep.mubr.f32.mxu0 %v231
    %401 = vmatmul.mubr.f32.gmra.mxu0 %v252
    %v402 = vpop.f32.mrf.mxu0
    %v403 = vadd.f32 %v324, %v402
    %v404 = vpop.f32.mrf.mxu0
    %405 = vmatprep.mubr.f32.mxu0 %v232
    %406 = vmatmul.mubr.f32.gmra.mxu0 %v253
    %v407 = vpop.f32.mrf.mxu0
    %v408 = vadd.f32 %v324, %v407
    %v409 = vpop.f32.mrf.mxu0
    %410 = vdwg.mxu0
    %411 = vmatprep.subr.mxu0 0.0
    %412 = vmatpush1.msra.mxu0 %v318
    %413 = vmatprep.subr.mxu0 0.0
    %414 = vmatpush1.msra.mxu0 %v317
    %415 = vmatprep.subr.mxu0 0.0
    %416 = vmatpush1.msra.mxu0 %v316
    %417 = vmatprep.subr.mxu0 0.0
    %418 = vmatpush1.msra.mxu0 %v315
    %419 = vmatprep.subr.mxu0 0.0
    %420 = vmatpush1.msra.mxu0 %v314
    %421 = vmatprep.subr.mxu0 0.0
    %422 = vmatpush1.msra.mxu0 %v313
    %423 = vmatprep.subr.mxu0 0.0
    %424 = vmatpush1.msra.mxu0 %v312
    %425 = vmatprep.subr.mxu0 0.0
    %426 = vmatpush1.msra.mxu0 %v311
    %427 = vmatprep.subr.mxu0 0.0
    %428 = vmatpush1.msra.mxu0 %v310
    %429 = vmatprep.subr.mxu0 0.0
    %430 = vmatpush1.msra.mxu0 %v309
    %431 = vmatprep.subr.mxu0 0.0
    %432 = vmatpush1.msra.mxu0 %v308
    %433 = vmatprep.subr.mxu0 0.0
    %434 = vmatpush1.msra.mxu0 %v307
    %435 = vmatprep.subr.mxu0 0.0
    %436 = vmatpush1.msra.mxu0 %v306
    %437 = vmatprep.subr.mxu0 0.0
    %438 = vmatpush1.msra.mxu0 %v305
    %439 = vmatprep.subr.mxu0 0.0
    %440 = vmatpush1.msra.mxu0 %v304
    %441 = vmatprep.subr.mxu0 0.0
    %442 = vmatpush1.msra.mxu0 %v303
    %443 = vmatprep.subr.mxu0 0.0
    %444 = vmatpush2.msra.mxu0 0.0
    %445 = vmatprep.subr.mxu0 0.0
    %446 = vmatpush2.msra.mxu0 0.0
    %447 = vmatprep.subr.mxu0 0.0
    %448 = vmatpush2.msra.mxu0 0.0
    %449 = vmatprep.subr.mxu0 0.0
    %450 = vmatpush2.msra.mxu0 0.0
    %451 = vmatprep.subr.mxu0 0.0
    %452 = vmatpush2.msra.mxu0 0.0
    %453 = vmatprep.subr.mxu0 0.0
    %454 = vmatpush2.msra.mxu0 0.0
    %455 = vmatprep.subr.mxu0 0.0
    %456 = vmatpush2.msra.mxu0 0.0
    %457 = vmatprep.subr.mxu0 0.0
    %458 = vmatpush2.msra.mxu0 0.0
    %459 = vmatprep.subr.mxu0 0.0
    %460 = vmatpush2.msra.mxu0 0.0
    %461 = vmatprep.subr.mxu0 0.0
    %462 = vmatpush2.msra.mxu0 0.0
    %463 = vmatprep.subr.mxu0 0.0
    %464 = vmatpush2.msra.mxu0 0.0
    %465 = vmatprep.subr.mxu0 0.0
    %466 = vmatpush2.msra.mxu0 0.0
    %467 = vmatprep.subr.mxu0 0.0
    %468 = vmatpush2.msra.mxu0 0.0
    %469 = vmatprep.subr.mxu0 0.0
    %470 = vmatpush2.msra.mxu0 0.0
    %471 = vmatprep.subr.mxu0 0.0
    %472 = vmatpush2.msra.mxu0 0.0
    %473 = vmatprep.subr.mxu0 0.0
    %474 = vmatpush2.msra.mxu0 0.0
    %475 = vmatprep.mubr.f32.mxu0 0.0
    %476 = vmatmul.mubr.f32.gmra.mxu0 %v267
    %v477 = vpop.f32.mrf.mxu0
    %v478 = vadd.f32 %v393, %v477
    %v479 = vpop.f32.mrf.mxu0
    %480 = vmatprep.mubr.f32.mxu0 0.0
    %481 = vmatmul.mubr.f32.gmra.mxu0 %v268
    %v482 = vpop.f32.mrf.mxu0
    %v483 = vadd.f32 %v398, %v482
    %v484 = vpop.f32.mrf.mxu0
    %485 = vmatprep.mubr.f32.mxu0 0.0
    %486 = vmatmul.mubr.f32.gmra.mxu0 %v269
    %v487 = vpop.f32.mrf.mxu0
    %v488 = vadd.f32 %v403, %v487
    %v489 = vpop.f32.mrf.mxu0
    %490 = vmatprep.mubr.f32.mxu0 0.0
    %491 = vmatmul.mubr.f32.gmra.mxu0 %v270
    %v492 = vpop.f32.mrf.mxu0
    %v493 = vadd.f32 %v408, %v492
    %v494 = vpop.f32.mrf.mxu0
    %495 = vdwg.mxu0
    %v496 = vmax.f32 %v478, 0.0
    %v497 = vmax.f32 %v483, 0.0
    %v498 = vmax.f32 %v488, 0.0
    %v499 = vmax.f32 %v493, 0.0
    %v504 = vrot.slane %v220, 7
    %v505 = vrot.slane %v221, 7
    %v506 = vsel %vm237, %v504, %v505
    %v507 = vrot.slane %v222, 7
    %v508 = vsel %vm237, %v505, %v507
    %v509 = vrot.slane %v223, 7
    %v510 = vsel %vm237, %v507, %v509
    %v515 = vsel %vm237, 0.0, %v504
    %v516 = vsel %vm207, 0.0, %v515
    %v517 = vsel %vm208, 0.0, %v506
    %v518 = vsel %vm209, 0.0, %v508
    %v519 = vsel %vm210, 0.0, %v510
    %v520 = vrot.slane %v220, 1
    %v521 = vrot.slane %v221, 1
    %v522 = vsel %vm254, %v520, %v521
    %v523 = vrot.slane %v222, 1
    %v524 = vsel %vm254, %v521, %v523
    %v525 = vrot.slane %v223, 1
    %v526 = vsel %vm254, %v523, %v525
    %v531 = vsel %vm254, %v525, 0.0
    %v532 = vsel %vm211, 0.0, %v522
    %v533 = vsel %vm212, 0.0, %v524
    %v534 = vsel %vm213, 0.0, %v526
    %v535 = vsel %vm214, 0.0, %v531
    %v536 = vld [vmem:[#allocation8] sm:$0xff]
    %v537 = vld [vmem:[#allocation8 + $0x8] sm:$0xff]
    %v538 = vld [vmem:[#allocation8 + $0x10] sm:$0xff]
    %v539 = vld [vmem:[#allocation8 + $0x18] sm:$0xff]
    %v540 = vld [vmem:[#allocation8 + $0x20] sm:$0xff]
    %v541 = vld [vmem:[#allocation8 + $0x28] sm:$0xff]
    %v542 = vld [vmem:[#allocation8 + $0x30] sm:$0xff]
    %v543 = vld [vmem:[#allocation8 + $0x38] sm:$0xff]
    %v544 = vld [vmem:[#allocation8 + $0x40] sm:$0xff]
    %v545 = vld [vmem:[#allocation8 + $0x48] sm:$0xff]
    %v546 = vld [vmem:[#allocation8 + $0x50] sm:$0xff]
    %v547 = vld [vmem:[#allocation8 + $0x58] sm:$0xff]
    %v548 = vld [vmem:[#allocation8 + $0x60] sm:$0xff]
    %v549 = vld [vmem:[#allocation8 + $0x68] sm:$0xff]
    %v550 = vld [vmem:[#allocation8 + $0x70] sm:$0xff]
    %v551 = vld [vmem:[#allocation8 + $0x78] sm:$0xff]
    %v552 = vld [vmem:[#allocation8 + $0x80] sm:$0xff]
    %v553 = vld [vmem:[#allocation8 + $0x88] sm:$0xff]
    %v554 = vld [vmem:[#allocation8 + $0x90] sm:$0xff]
    %v555 = vld [vmem:[#allocation8 + $0x98] sm:$0xff]
    %v556 = vld [vmem:[#allocation8 + $0xa0] sm:$0xff]
    %v557 = vld [vmem:[#allocation8 + $0xa8] sm:$0xff]
    %v558 = vld [vmem:[#allocation8 + $0xb0] sm:$0xff]
    %v559 = vld [vmem:[#allocation8 + $0xb8] sm:$0xff]
    %v560 = vld [vmem:[#allocation8 + $0xc0] sm:$0xff]
    %v561 = vld [vmem:[#allocation8 + $0xc8] sm:$0xff]
    %v562 = vld [vmem:[#allocation8 + $0xd0] sm:$0xff]
    %v563 = vld [vmem:[#allocation8 + $0xd8] sm:$0xff]
    %v564 = vld [vmem:[#allocation8 + $0xe0] sm:$0xff]
    %v565 = vld [vmem:[#allocation8 + $0xe8] sm:$0xff]
    %v566 = vld [vmem:[#allocation8 + $0xf0] sm:$0xff]
    %v567 = vld [vmem:[#allocation8 + $0xf8] sm:$0xff]
    %v568 = vld [vmem:[#allocation8 + $0x100] sm:$0xff]
    %v569 = vld [vmem:[#allocation8 + $0x108] sm:$0xff]
    %v570 = vld [vmem:[#allocation8 + $0x110] sm:$0xff]
    %v571 = vld [vmem:[#allocation8 + $0x118] sm:$0xff]
    %v572 = vld [vmem:[#allocation8 + $0x120] sm:$0xff]
    %v573 = vld [vmem:[#allocation8 + $0x128] sm:$0xff]
    %v574 = vld [vmem:[#allocation8 + $0x130] sm:$0xff]
    %v575 = vld [vmem:[#allocation8 + $0x138] sm:$0xff]
    %v576 = vld [vmem:[#allocation8 + $0x140] sm:$0xff]
    %v577 = vld [vmem:[#allocation8 + $0x148] sm:$0xff]
    %v578 = vld [vmem:[#allocation8 + $0x150] sm:$0xff]
    %v579 = vld [vmem:[#allocation8 + $0x158] sm:$0xff]
    %v580 = vld [vmem:[#allocation8 + $0x160] sm:$0xff]
    %v581 = vld [vmem:[#allocation8 + $0x168] sm:$0xff]
    %v582 = vld [vmem:[#allocation8 + $0x170] sm:$0xff]
    %v583 = vld [vmem:[#allocation8 + $0x178] sm:$0xff]
    %v588 = vrot.slane %v496, 7
    %v589 = vrot.slane %v497, 7
    %v590 = vsel %vm237, %v588, %v589
    %v591 = vrot.slane %v498, 7
    %v592 = vsel %vm237, %v589, %v591
    %v593 = vrot.slane %v499, 7
    %v594 = vsel %vm237, %v591, %v593
    %v599 = vsel %vm237, 0.0, %v588
    %v600 = vsel %vm207, 0.0, %v599
    %v601 = vsel %vm208, 0.0, %v590
    %v602 = vsel %vm209, 0.0, %v592
    %v603 = vsel %vm210, 0.0, %v594
    %v604 = vrot.slane %v496, 1
    %v605 = vrot.slane %v497, 1
    %v606 = vsel %vm254, %v604, %v605
    %v607 = vrot.slane %v498, 1
    %v608 = vsel %vm254, %v605, %v607
    %v609 = vrot.slane %v499, 1
    %v610 = vsel %vm254, %v607, %v609
    %v615 = vsel %vm254, %v609, 0.0
    %v616 = vsel %vm211, 0.0, %v606
    %v617 = vsel %vm212, 0.0, %v608
    %v618 = vsel %vm213, 0.0, %v610
    %v619 = vsel %vm214, 0.0, %v615
    %v620 = vld [vmem:[#allocation10] sm:$0xff]
    %v621 = vld [vmem:[#allocation10 + $0x8] sm:$0xff]
    %v622 = vld [vmem:[#allocation10 + $0x10] sm:$0xff]
    %v623 = vld [vmem:[#allocation10 + $0x18] sm:$0xff]
    %v624 = vld [vmem:[#allocation10 + $0x20] sm:$0xff]
    %v625 = vld [vmem:[#allocation10 + $0x28] sm:$0xff]
    %v626 = vld [vmem:[#allocation10 + $0x30] sm:$0xff]
    %v627 = vld [vmem:[#allocation10 + $0x38] sm:$0xff]
    %v628 = vld [vmem:[#allocation10 + $0x40] sm:$0xff]
    %v629 = vld [vmem:[#allocation10 + $0x48] sm:$0xff]
    %v630 = vld [vmem:[#allocation10 + $0x50] sm:$0xff]
    %v631 = vld [vmem:[#allocation10 + $0x58] sm:$0xff]
    %v632 = vld [vmem:[#allocation10 + $0x60] sm:$0xff]
    %v633 = vld [vmem:[#allocation10 + $0x68] sm:$0xff]
    %v634 = vld [vmem:[#allocation10 + $0x70] sm:$0xff]
    %v635 = vld [vmem:[#allocation10 + $0x78] sm:$0xff]
    %v636 = vld [vmem:[#allocation10 + $0x80] sm:$0xff]
    %v637 = vld [vmem:[#allocation10 + $0x88] sm:$0xff]
    %v638 = vld [vmem:[#allocation10 + $0x90] sm:$0xff]
    %v639 = vld [vmem:[#allocation10 + $0x98] sm:$0xff]
    %v640 = vld [vmem:[#allocation10 + $0xa0] sm:$0xff]
    %v641 = vld [vmem:[#allocation10 + $0xa8] sm:$0xff]
    %v642 = vld [vmem:[#allocation10 + $0xb0] sm:$0xff]
    %v643 = vld [vmem:[#allocation10 + $0xb8] sm:$0xff]
    %v644 = vld [vmem:[#allocation10 + $0xc0] sm:$0xff]
    %v645 = vld [vmem:[#allocation10 + $0xc8] sm:$0xff]
    %v646 = vld [vmem:[#allocation10 + $0xd0] sm:$0xff]
    %v647 = vld [vmem:[#allocation10 + $0xd8] sm:$0xff]
    %v648 = vld [vmem:[#allocation10 + $0xe0] sm:$0xff]
    %v649 = vld [vmem:[#allocation10 + $0xe8] sm:$0xff]
    %v650 = vld [vmem:[#allocation10 + $0xf0] sm:$0xff]
    %v651 = vld [vmem:[#allocation10 + $0xf8] sm:$0xff]
    %v652 = vld [vmem:[#allocation10 + $0x100] sm:$0xff]
    %v653 = vld [vmem:[#allocation10 + $0x108] sm:$0xff]
    %v654 = vld [vmem:[#allocation10 + $0x110] sm:$0xff]
    %v655 = vld [vmem:[#allocation10 + $0x118] sm:$0xff]
    %v656 = vld [vmem:[#allocation10 + $0x120] sm:$0xff]
    %v657 = vld [vmem:[#allocation10 + $0x128] sm:$0xff]
    %v658 = vld [vmem:[#allocation10 + $0x130] sm:$0xff]
    %v659 = vld [vmem:[#allocation10 + $0x138] sm:$0xff]
    %v660 = vld [vmem:[#allocation10 + $0x140] sm:$0xff]
    %v661 = vld [vmem:[#allocation10 + $0x148] sm:$0xff]
    %v662 = vld [vmem:[#allocation10 + $0x150] sm:$0xff]
    %v663 = vld [vmem:[#allocation10 + $0x158] sm:$0xff]
    %v664 = vld [vmem:[#allocation10 + $0x160] sm:$0xff]
    %v665 = vld [vmem:[#allocation10 + $0x168] sm:$0xff]
    %v666 = vld [vmem:[#allocation10 + $0x170] sm:$0xff]
    %v667 = vld [vmem:[#allocation10 + $0x178] sm:$0xff]
    %668 = vmatprep.subr.mxu0 0.0
    %669 = vmatpush1.msra.mxu0 %v635
    %670 = vmatprep.subr.mxu0 0.0
    %671 = vmatpush1.msra.mxu0 %v634
    %672 = vmatprep.subr.mxu0 0.0
    %673 = vmatpush1.msra.mxu0 %v633
    %674 = vmatprep.subr.mxu0 0.0
    %675 = vmatpush1.msra.mxu0 %v632
    %676 = vmatprep.subr.mxu0 0.0
    %677 = vmatpush1.msra.mxu0 %v631
    %678 = vmatprep.subr.mxu0 0.0
    %679 = vmatpush1.msra.mxu0 %v630
    %680 = vmatprep.subr.mxu0 0.0
    %681 = vmatpush1.msra.mxu0 %v629
    %682 = vmatprep.subr.mxu0 0.0
    %683 = vmatpush1.msra.mxu0 %v628
    %684 = vmatprep.subr.mxu0 0.0
    %685 = vmatpush1.msra.mxu0 %v627
    %686 = vmatprep.subr.mxu0 0.0
    %687 = vmatpush1.msra.mxu0 %v626
    %688 = vmatprep.subr.mxu0 0.0
    %689 = vmatpush1.msra.mxu0 %v625
    %690 = vmatprep.subr.mxu0 0.0
    %691 = vmatpush1.msra.mxu0 %v624
    %692 = vmatprep.subr.mxu0 0.0
    %693 = vmatpush1.msra.mxu0 %v623
    %694 = vmatprep.subr.mxu0 0.0
    %695 = vmatpush1.msra.mxu0 %v622
    %696 = vmatprep.subr.mxu0 0.0
    %697 = vmatpush1.msra.mxu0 %v621
    %698 = vmatprep.subr.mxu0 0.0
    %699 = vmatpush1.msra.mxu0 %v620
    %700 = vmatprep.subr.mxu0 0.0
    %701 = vmatpush2.msra.mxu0 %v651
    %702 = vmatprep.subr.mxu0 0.0
    %703 = vmatpush2.msra.mxu0 %v650
    %704 = vmatprep.subr.mxu0 0.0
    %705 = vmatpush2.msra.mxu0 %v649
    %706 = vmatprep.subr.mxu0 0.0
    %707 = vmatpush2.msra.mxu0 %v648
    %708 = vmatprep.subr.mxu0 0.0
    %709 = vmatpush2.msra.mxu0 %v647
    %710 = vmatprep.subr.mxu0 0.0
    %711 = vmatpush2.msra.mxu0 %v646
    %712 = vmatprep.subr.mxu0 0.0
    %713 = vmatpush2.msra.mxu0 %v645
    %714 = vmatprep.subr.mxu0 0.0
    %715 = vmatpush2.msra.mxu0 %v644
    %716 = vmatprep.subr.mxu0 0.0
    %717 = vmatpush2.msra.mxu0 %v643
    %718 = vmatprep.subr.mxu0 0.0
    %719 = vmatpush2.msra.mxu0 %v642
    %720 = vmatprep.subr.mxu0 0.0
    %721 = vmatpush2.msra.mxu0 %v641
    %722 = vmatprep.subr.mxu0 0.0
    %723 = vmatpush2.msra.mxu0 %v640
    %724 = vmatprep.subr.mxu0 0.0
    %725 = vmatpush2.msra.mxu0 %v639
    %726 = vmatprep.subr.mxu0 0.0
    %727 = vmatpush2.msra.mxu0 %v638
    %728 = vmatprep.subr.mxu0 0.0
    %729 = vmatpush2.msra.mxu0 %v637
    %730 = vmatprep.subr.mxu0 0.0
    %731 = vmatpush2.msra.mxu0 %v636
    %732 = vmatprep.mubr.f32.mxu0 %v496
    %733 = vmatmul.mubr.f32.gmra.mxu0 %v600
    %v734 = vpop.f32.mrf.mxu0
    %v735 = vadd.f32 0.0, %v734
    %v736 = vpop.f32.mrf.mxu0
    %737 = vmatprep.mubr.f32.mxu0 %v497
    %738 = vmatmul.mubr.f32.gmra.mxu0 %v601
    %v739 = vpop.f32.mrf.mxu0
    %v740 = vadd.f32 0.0, %v739
    %v741 = vpop.f32.mrf.mxu0
    %742 = vmatprep.mubr.f32.mxu0 %v498
    %743 = vmatmul.mubr.f32.gmra.mxu0 %v602
    %v744 = vpop.f32.mrf.mxu0
    %v745 = vadd.f32 0.0, %v744
    %v746 = vpop.f32.mrf.mxu0
    %747 = vmatprep.mubr.f32.mxu0 %v499
    %748 = vmatmul.mubr.f32.gmra.mxu0 %v603
    %v749 = vpop.f32.mrf.mxu0
    %v750 = vadd.f32 0.0, %v749
    %v751 = vpop.f32.mrf.mxu0
    %752 = vdwg.mxu0
    %753 = vmatprep.subr.mxu0 0.0
    %754 = vmatpush1.msra.mxu0 %v667
    %755 = vmatprep.subr.mxu0 0.0
    %756 = vmatpush1.msra.mxu0 %v666
    %757 = vmatprep.subr.mxu0 0.0
    %758 = vmatpush1.msra.mxu0 %v665
    %759 = vmatprep.subr.mxu0 0.0
    %760 = vmatpush1.msra.mxu0 %v664
    %761 = vmatprep.subr.mxu0 0.0
    %762 = vmatpush1.msra.mxu0 %v663
    %763 = vmatprep.subr.mxu0 0.0
    %764 = vmatpush1.msra.mxu0 %v662
    %765 = vmatprep.subr.mxu0 0.0
    %766 = vmatpush1.msra.mxu0 %v661
    %767 = vmatprep.subr.mxu0 0.0
    %768 = vmatpush1.msra.mxu0 %v660
    %769 = vmatprep.subr.mxu0 0.0
    %770 = vmatpush1.msra.mxu0 %v659
    %771 = vmatprep.subr.mxu0 0.0
    %772 = vmatpush1.msra.mxu0 %v658
    %773 = vmatprep.subr.mxu0 0.0
    %774 = vmatpush1.msra.mxu0 %v657
    %775 = vmatprep.subr.mxu0 0.0
    %776 = vmatpush1.msra.mxu0 %v656
    %777 = vmatprep.subr.mxu0 0.0
    %778 = vmatpush1.msra.mxu0 %v655
    %779 = vmatprep.subr.mxu0 0.0
    %780 = vmatpush1.msra.mxu0 %v654
    %781 = vmatprep.subr.mxu0 0.0
    %782 = vmatpush1.msra.mxu0 %v653
    %783 = vmatprep.subr.mxu0 0.0
    %784 = vmatpush1.msra.mxu0 %v652
    %785 = vmatprep.subr.mxu0 0.0
    %786 = vmatpush2.msra.mxu0 0.0
    %787 = vmatprep.subr.mxu0 0.0
    %788 = vmatpush2.msra.mxu0 0.0
    %789 = vmatprep.subr.mxu0 0.0
    %790 = vmatpush2.msra.mxu0 0.0
    %791 = vmatprep.subr.mxu0 0.0
    %792 = vmatpush2.msra.mxu0 0.0
    %793 = vmatprep.subr.mxu0 0.0
    %794 = vmatpush2.msra.mxu0 0.0
    %795 = vmatprep.subr.mxu0 0.0
    %796 = vmatpush2.msra.mxu0 0.0
    %797 = vmatprep.subr.mxu0 0.0
    %798 = vmatpush2.msra.mxu0 0.0
    %799 = vmatprep.subr.mxu0 0.0
    %800 = vmatpush2.msra.mxu0 0.0
    %801 = vmatprep.subr.mxu0 0.0
    %802 = vmatpush2.msra.mxu0 0.0
    %803 = vmatprep.subr.mxu0 0.0
    %804 = vmatpush2.msra.mxu0 0.0
    %805 = vmatprep.subr.mxu0 0.0
    %806 = vmatpush2.msra.mxu0 0.0
    %807 = vmatprep.subr.mxu0 0.0
    %808 = vmatpush2.msra.mxu0 0.0
    %809 = vmatprep.subr.mxu0 0.0
    %810 = vmatpush2.msra.mxu0 0.0
    %811 = vmatprep.subr.mxu0 0.0
    %812 = vmatpush2.msra.mxu0 0.0
    %813 = vmatprep.subr.mxu0 0.0
    %814 = vmatpush2.msra.mxu0 0.0
    %815 = vmatprep.subr.mxu0 0.0
    %816 = vmatpush2.msra.mxu0 0.0
    %817 = vmatprep.mubr.f32.mxu0 0.0
    %818 = vmatmul.mubr.f32.gmra.mxu0 %v616
    %v819 = vpop.f32.mrf.mxu0
    %v820 = vadd.f32 %v735, %v819
    %v821 = vpop.f32.mrf.mxu0
    %822 = vmatprep.mubr.f32.mxu0 0.0
    %823 = vmatmul.mubr.f32.gmra.mxu0 %v617
    %v824 = vpop.f32.mrf.mxu0
    %v825 = vadd.f32 %v740, %v824
    %v826 = vpop.f32.mrf.mxu0
    %827 = vmatprep.mubr.f32.mxu0 0.0
    %828 = vmatmul.mubr.f32.gmra.mxu0 %v618
    %v829 = vpop.f32.mrf.mxu0
    %v830 = vadd.f32 %v745, %v829
    %v831 = vpop.f32.mrf.mxu0
    %832 = vmatprep.mubr.f32.mxu0 0.0
    %833 = vmatmul.mubr.f32.gmra.mxu0 %v619
    %v834 = vpop.f32.mrf.mxu0
    %v835 = vadd.f32 %v750, %v834
    %v836 = vpop.f32.mrf.mxu0
    %837 = vdwg.mxu0
    %838 = vmatprep.subr.mxu0 0.0
    %839 = vmatpush1.msra.mxu0 %v551
    %840 = vmatprep.subr.mxu0 0.0
    %841 = vmatpush1.msra.mxu0 %v550
    %842 = vmatprep.subr.mxu0 0.0
    %843 = vmatpush1.msra.mxu0 %v549
    %844 = vmatprep.subr.mxu0 0.0
    %845 = vmatpush1.msra.mxu0 %v548
    %846 = vmatprep.subr.mxu0 0.0
    %847 = vmatpush1.msra.mxu0 %v547
    %848 = vmatprep.subr.mxu0 0.0
    %849 = vmatpush1.msra.mxu0 %v546
    %850 = vmatprep.subr.mxu0 0.0
    %851 = vmatpush1.msra.mxu0 %v545
    %852 = vmatprep.subr.mxu0 0.0
    %853 = vmatpush1.msra.mxu0 %v544
    %854 = vmatprep.subr.mxu0 0.0
    %855 = vmatpush1.msra.mxu0 %v543
    %856 = vmatprep.subr.mxu0 0.0
    %857 = vmatpush1.msra.mxu0 %v542
    %858 = vmatprep.subr.mxu0 0.0
    %859 = vmatpush1.msra.mxu0 %v541
    %860 = vmatprep.subr.mxu0 0.0
    %861 = vmatpush1.msra.mxu0 %v540
    %862 = vmatprep.subr.mxu0 0.0
    %863 = vmatpush1.msra.mxu0 %v539
    %864 = vmatprep.subr.mxu0 0.0
    %865 = vmatpush1.msra.mxu0 %v538
    %866 = vmatprep.subr.mxu0 0.0
    %867 = vmatpush1.msra.mxu0 %v537
    %868 = vmatprep.subr.mxu0 0.0
    %869 = vmatpush1.msra.mxu0 %v536
    %870 = vmatprep.subr.mxu0 0.0
    %871 = vmatpush2.msra.mxu0 %v567
    %872 = vmatprep.subr.mxu0 0.0
    %873 = vmatpush2.msra.mxu0 %v566
    %874 = vmatprep.subr.mxu0 0.0
    %875 = vmatpush2.msra.mxu0 %v565
    %876 = vmatprep.subr.mxu0 0.0
    %877 = vmatpush2.msra.mxu0 %v564
    %878 = vmatprep.subr.mxu0 0.0
    %879 = vmatpush2.msra.mxu0 %v563
    %880 = vmatprep.subr.mxu0 0.0
    %881 = vmatpush2.msra.mxu0 %v562
    %882 = vmatprep.subr.mxu0 0.0
    %883 = vmatpush2.msra.mxu0 %v561
    %884 = vmatprep.subr.mxu0 0.0
    %885 = vmatpush2.msra.mxu0 %v560
    %886 = vmatprep.subr.mxu0 0.0
    %887 = vmatpush2.msra.mxu0 %v559
    %888 = vmatprep.subr.mxu0 0.0
    %889 = vmatpush2.msra.mxu0 %v558
    %890 = vmatprep.subr.mxu0 0.0
    %891 = vmatpush2.msra.mxu0 %v557
    %892 = vmatprep.subr.mxu0 0.0
    %893 = vmatpush2.msra.mxu0 %v556
    %894 = vmatprep.subr.mxu0 0.0
    %895 = vmatpush2.msra.mxu0 %v555
    %896 = vmatprep.subr.mxu0 0.0
    %897 = vmatpush2.msra.mxu0 %v554
    %898 = vmatprep.subr.mxu0 0.0
    %899 = vmatpush2.msra.mxu0 %v553
    %900 = vmatprep.subr.mxu0 0.0
    %901 = vmatpush2.msra.mxu0 %v552
    %902 = vmatprep.mubr.f32.mxu0 %v220
    %903 = vmatmul.mubr.f32.gmra.mxu0 %v516
    %v904 = vpop.f32.mrf.mxu0
    %v905 = vadd.f32 %v820, %v904
    %v906 = vpop.f32.mrf.mxu0
    %907 = vmatprep.mubr.f32.mxu0 %v221
    %908 = vmatmul.mubr.f32.gmra.mxu0 %v517
    %v909 = vpop.f32.mrf.mxu0
    %v910 = vadd.f32 %v825, %v909
    %v911 = vpop.f32.mrf.mxu0
    %912 = vmatprep.mubr.f32.mxu0 %v222
    %913 = vmatmul.mubr.f32.gmra.mxu0 %v518
    %v914 = vpop.f32.mrf.mxu0
    %v915 = vadd.f32 %v830, %v914
    %v916 = vpop.f32.mrf.mxu0
    %917 = vmatprep.mubr.f32.mxu0 %v223
    %918 = vmatmul.mubr.f32.gmra.mxu0 %v519
    %v919 = vpop.f32.mrf.mxu0
    %v920 = vadd.f32 %v835, %v919
    %v921 = vpop.f32.mrf.mxu0
    %922 = vdwg.mxu0
    %923 = vmatprep.subr.mxu0 0.0
    %924 = vmatpush1.msra.mxu0 %v583
    %925 = vmatprep.subr.mxu0 0.0
    %926 = vmatpush1.msra.mxu0 %v582
    %927 = vmatprep.subr.mxu0 0.0
    %928 = vmatpush1.msra.mxu0 %v581
    %929 = vmatprep.subr.mxu0 0.0
    %930 = vmatpush1.msra.mxu0 %v580
    %931 = vmatprep.subr.mxu0 0.0
    %932 = vmatpush1.msra.mxu0 %v579
    %933 = vmatprep.subr.mxu0 0.0
    %934 = vmatpush1.msra.mxu0 %v578
    %935 = vmatprep.subr.mxu0 0.0
    %936 = vmatpush1.msra.mxu0 %v577
    %937 = vmatprep.subr.mxu0 0.0
    %938 = vmatpush1.msra.mxu0 %v576
    %939 = vmatprep.subr.mxu0 0.0
    %940 = vmatpush1.msra.mxu0 %v575
    %941 = vmatprep.subr.mxu0 0.0
    %942 = vmatpush1.msra.mxu0 %v574
    %943 = vmatprep.subr.mxu0 0.0
    %944 = vmatpush1.msra.mxu0 %v573
    %945 = vmatprep.subr.mxu0 0.0
    %946 = vmatpush1.msra.mxu0 %v572
    %947 = vmatprep.subr.mxu0 0.0
    %948 = vmatpush1.msra.mxu0 %v571
    %949 = vmatprep.subr.mxu0 0.0
    %950 = vmatpush1.msra.mxu0 %v570
    %951 = vmatprep.subr.mxu0 0.0
    %952 = vmatpush1.msra.mxu0 %v569
    %953 = vmatprep.subr.mxu0 0.0
    %954 = vmatpush1.msra.mxu0 %v568
    %955 = vmatprep.subr.mxu0 0.0
    %956 = vmatpush2.msra.mxu0 0.0
    %957 = vmatprep.subr.mxu0 0.0
    %958 = vmatpush2.msra.mxu0 0.0
    %959 = vmatprep.subr.mxu0 0.0
    %960 = vmatpush2.msra.mxu0 0.0
    %961 = vmatprep.subr.mxu0 0.0
    %962 = vmatpush2.msra.mxu0 0.0
    %963 = vmatprep.subr.mxu0 0.0
    %964 = vmatpush2.msra.mxu0 0.0
    %965 = vmatprep.subr.mxu0 0.0
    %966 = vmatpush2.msra.mxu0 0.0
    %967 = vmatprep.subr.mxu0 0.0
    %968 = vmatpush2.msra.mxu0 0.0
    %969 = vmatprep.subr.mxu0 0.0
    %970 = vmatpush2.msra.mxu0 0.0
    %971 = vmatprep.subr.mxu0 0.0
    %972 = vmatpush2.msra.mxu0 0.0
    %973 = vmatprep.subr.mxu0 0.0
    %974 = vmatpush2.msra.mxu0 0.0
    %975 = vmatprep.subr.mxu0 0.0
    %976 = vmatpush2.msra.mxu0 0.0
    %977 = vmatprep.subr.mxu0 0.0
    %978 = vmatpush2.msra.mxu0 0.0
    %979 = vmatprep.subr.mxu0 0.0
    %980 = vmatpush2.msra.mxu0 0.0
    %981 = vmatprep.subr.mxu0 0.0
    %982 = vmatpush2.msra.mxu0 0.0
    %983 = vmatprep.subr.mxu0 0.0
    %984 = vmatpush2.msra.mxu0 0.0
    %985 = vmatprep.subr.mxu0 0.0
    %986 = vmatpush2.msra.mxu0 0.0
    %987 = vmatprep.mubr.f32.mxu0 0.0
    %988 = vmatmul.mubr.f32.gmra.mxu0 %v532
    %v989 = vpop.f32.mrf.mxu0
    %v990 = vadd.f32 %v905, %v989
    %v991 = vpop.f32.mrf.mxu0
    %992 = vmatprep.mubr.f32.mxu0 0.0
    %993 = vmatmul.mubr.f32.gmra.mxu0 %v533
    %v994 = vpop.f32.mrf.mxu0
    %v995 = vadd.f32 %v910, %v994
    %v996 = vpop.f32.mrf.mxu0
    %997 = vmatprep.mubr.f32.mxu0 0.0
    %998 = vmatmul.mubr.f32.gmra.mxu0 %v534
    %v999 = vpop.f32.mrf.mxu0
    %v1000 = vadd.f32 %v915, %v999
    %v1001 = vpop.f32.mrf.mxu0
    %1002 = vmatprep.mubr.f32.mxu0 0.0
    %1003 = vmatmul.mubr.f32.gmra.mxu0 %v535
    %v1004 = vpop.f32.mrf.mxu0
    %v1005 = vadd.f32 %v920, %v1004
    %v1006 = vpop.f32.mrf.mxu0
    %1007 = vdwg.mxu0
    %v1008 = vld [vmem:[%s6] sm:$0x1]
    %v1010 = vlaneseq
    %v1011 = vshrl.u32 %v1010, 7
    %v1012 = vsub.s32 0, %v1011
    %v1013 = vrot.slane %v1008, %v1012
    %v1015 = vadd.f32 %v990, %v1013
    %v1016 = vadd.f32 %v995, %v1013
    %v1017 = vadd.f32 %v1000, %v1013
    %v1018 = vadd.f32 %v1005, %v1013
    %v1019 = vmax.f32 %v1015, 0.0
    %v1020 = vmax.f32 %v1016, 0.0
    %v1021 = vmax.f32 %v1017, 0.0
    %v1022 = vmax.f32 %v1018, 0.0
    %v1027 = vrot.slane %v1019, 7
    %v1028 = vrot.slane %v1020, 7
    %v1029 = vsel %vm237, %v1027, %v1028
    %v1030 = vrot.slane %v1021, 7
    %v1031 = vsel %vm237, %v1028, %v1030
    %v1032 = vrot.slane %v1022, 7
    %v1033 = vsel %vm237, %v1030, %v1032
    %v1038 = vsel %vm237, 0.0, %v1027
    %v1039 = vsel %vm207, 0.0, %v1038
    %v1040 = vsel %vm208, 0.0, %v1029
    %v1041 = vsel %vm209, 0.0, %v1031
    %v1042 = vsel %vm210, 0.0, %v1033
    %v1043 = vrot.slane %v1019, 1
    %v1044 = vrot.slane %v1020, 1
    %v1045 = vsel %vm254, %v1043, %v1044
    %v1046 = vrot.slane %v1021, 1
    %v1047 = vsel %vm254, %v1044, %v1046
    %v1048 = vrot.slane %v1022, 1
    %v1049 = vsel %vm254, %v1046, %v1048
    %v1054 = vsel %vm254, %v1048, 0.0
    %v1055 = vsel %vm211, 0.0, %v1045
    %v1056 = vsel %vm212, 0.0, %v1047
    %v1057 = vsel %vm213, 0.0, %v1049
    %v1058 = vsel %vm214, 0.0, %v1054
    %v1059 = vld [vmem:[#allocation11] sm:$0xff]
    %v1060 = vld [vmem:[#allocation11 + $0x8] sm:$0xff]
    %v1061 = vld [vmem:[#allocation11 + $0x10] sm:$0xff]
    %v1062 = vld [vmem:[#allocation11 + $0x18] sm:$0xff]
    %v1063 = vld [vmem:[#allocation11 + $0x20] sm:$0xff]
    %v1064 = vld [vmem:[#allocation11 + $0x28] sm:$0xff]
    %v1065 = vld [vmem:[#allocation11 + $0x30] sm:$0xff]
    %v1066 = vld [vmem:[#allocation11 + $0x38] sm:$0xff]
    %v1067 = vld [vmem:[#allocation11 + $0x40] sm:$0xff]
    %v1068 = vld [vmem:[#allocation11 + $0x48] sm:$0xff]
    %v1069 = vld [vmem:[#allocation11 + $0x50] sm:$0xff]
    %v1070 = vld [vmem:[#allocation11 + $0x58] sm:$0xff]
    %v1071 = vld [vmem:[#allocation11 + $0x60] sm:$0xff]
    %v1072 = vld [vmem:[#allocation11 + $0x68] sm:$0xff]
    %v1073 = vld [vmem:[#allocation11 + $0x70] sm:$0xff]
    %v1074 = vld [vmem:[#allocation11 + $0x78] sm:$0xff]
    %v1075 = vld [vmem:[#allocation11 + $0x80] sm:$0xff]
    %v1076 = vld [vmem:[#allocation11 + $0x88] sm:$0xff]
    %v1077 = vld [vmem:[#allocation11 + $0x90] sm:$0xff]
    %v1078 = vld [vmem:[#allocation11 + $0x98] sm:$0xff]
    %v1079 = vld [vmem:[#allocation11 + $0xa0] sm:$0xff]
    %v1080 = vld [vmem:[#allocation11 + $0xa8] sm:$0xff]
    %v1081 = vld [vmem:[#allocation11 + $0xb0] sm:$0xff]
    %v1082 = vld [vmem:[#allocation11 + $0xb8] sm:$0xff]
    %v1083 = vld [vmem:[#allocation11 + $0xc0] sm:$0xff]
    %v1084 = vld [vmem:[#allocation11 + $0xc8] sm:$0xff]
    %v1085 = vld [vmem:[#allocation11 + $0xd0] sm:$0xff]
    %v1086 = vld [vmem:[#allocation11 + $0xd8] sm:$0xff]
    %v1087 = vld [vmem:[#allocation11 + $0xe0] sm:$0xff]
    %v1088 = vld [vmem:[#allocation11 + $0xe8] sm:$0xff]
    %v1089 = vld [vmem:[#allocation11 + $0xf0] sm:$0xff]
    %v1090 = vld [vmem:[#allocation11 + $0xf8] sm:$0xff]
    %v1091 = vld [vmem:[#allocation11 + $0x100] sm:$0xff]
    %v1092 = vld [vmem:[#allocation11 + $0x108] sm:$0xff]
    %v1093 = vld [vmem:[#allocation11 + $0x110] sm:$0xff]
    %v1094 = vld [vmem:[#allocation11 + $0x118] sm:$0xff]
    %v1095 = vld [vmem:[#allocation11 + $0x120] sm:$0xff]
    %v1096 = vld [vmem:[#allocation11 + $0x128] sm:$0xff]
    %v1097 = vld [vmem:[#allocation11 + $0x130] sm:$0xff]
    %v1098 = vld [vmem:[#allocation11 + $0x138] sm:$0xff]
    %v1099 = vld [vmem:[#allocation11 + $0x140] sm:$0xff]
    %v1100 = vld [vmem:[#allocation11 + $0x148] sm:$0xff]
    %v1101 = vld [vmem:[#allocation11 + $0x150] sm:$0xff]
    %v1102 = vld [vmem:[#allocation11 + $0x158] sm:$0xff]
    %v1103 = vld [vmem:[#allocation11 + $0x160] sm:$0xff]
    %v1104 = vld [vmem:[#allocation11 + $0x168] sm:$0xff]
    %v1105 = vld [vmem:[#allocation11 + $0x170] sm:$0xff]
    %v1106 = vld [vmem:[#allocation11 + $0x178] sm:$0xff]
    %v1107 = vld [vmem:[%s8] sm:$0x1]
    %v1109 = vlaneseq
    %v1110 = vshrl.u32 %v1109, 7
    %v1111 = vsub.s32 0, %v1110
    %v1112 = vrot.slane %v1107, %v1111
    %1114 = vmatprep.subr.mxu0 0.0
    %1115 = vmatpush1.msra.mxu0 %v1074
    %1116 = vmatprep.subr.mxu0 0.0
    %1117 = vmatpush1.msra.mxu0 %v1073
    %1118 = vmatprep.subr.mxu0 0.0
    %1119 = vmatpush1.msra.mxu0 %v1072
    %1120 = vmatprep.subr.mxu0 0.0
    %1121 = vmatpush1.msra.mxu0 %v1071
    %1122 = vmatprep.subr.mxu0 0.0
    %1123 = vmatpush1.msra.mxu0 %v1070
    %1124 = vmatprep.subr.mxu0 0.0
    %1125 = vmatpush1.msra.mxu0 %v1069
    %1126 = vmatprep.subr.mxu0 0.0
    %1127 = vmatpush1.msra.mxu0 %v1068
    %1128 = vmatprep.subr.mxu0 0.0
    %1129 = vmatpush1.msra.mxu0 %v1067
    %1130 = vmatprep.subr.mxu0 0.0
    %1131 = vmatpush1.msra.mxu0 %v1066
    %1132 = vmatprep.subr.mxu0 0.0
    %1133 = vmatpush1.msra.mxu0 %v1065
    %1134 = vmatprep.subr.mxu0 0.0
    %1135 = vmatpush1.msra.mxu0 %v1064
    %1136 = vmatprep.subr.mxu0 0.0
    %1137 = vmatpush1.msra.mxu0 %v1063
    %1138 = vmatprep.subr.mxu0 0.0
    %1139 = vmatpush1.msra.mxu0 %v1062
    %1140 = vmatprep.subr.mxu0 0.0
    %1141 = vmatpush1.msra.mxu0 %v1061
    %1142 = vmatprep.subr.mxu0 0.0
    %1143 = vmatpush1.msra.mxu0 %v1060
    %1144 = vmatprep.subr.mxu0 0.0
    %1145 = vmatpush1.msra.mxu0 %v1059
    %1146 = vmatprep.subr.mxu0 0.0
    %1147 = vmatpush2.msra.mxu0 %v1090
    %1148 = vmatprep.subr.mxu0 0.0
    %1149 = vmatpush2.msra.mxu0 %v1089
    %1150 = vmatprep.subr.mxu0 0.0
    %1151 = vmatpush2.msra.mxu0 %v1088
    %1152 = vmatprep.subr.mxu0 0.0
    %1153 = vmatpush2.msra.mxu0 %v1087
    %1154 = vmatprep.subr.mxu0 0.0
    %1155 = vmatpush2.msra.mxu0 %v1086
    %1156 = vmatprep.subr.mxu0 0.0
    %1157 = vmatpush2.msra.mxu0 %v1085
    %1158 = vmatprep.subr.mxu0 0.0
    %1159 = vmatpush2.msra.mxu0 %v1084
    %1160 = vmatprep.subr.mxu0 0.0
    %1161 = vmatpush2.msra.mxu0 %v1083
    %1162 = vmatprep.subr.mxu0 0.0
    %1163 = vmatpush2.msra.mxu0 %v1082
    %1164 = vmatprep.subr.mxu0 0.0
    %1165 = vmatpush2.msra.mxu0 %v1081
    %1166 = vmatprep.subr.mxu0 0.0
    %1167 = vmatpush2.msra.mxu0 %v1080
    %1168 = vmatprep.subr.mxu0 0.0
    %1169 = vmatpush2.msra.mxu0 %v1079
    %1170 = vmatprep.subr.mxu0 0.0
    %1171 = vmatpush2.msra.mxu0 %v1078
    %1172 = vmatprep.subr.mxu0 0.0
    %1173 = vmatpush2.msra.mxu0 %v1077
    %1174 = vmatprep.subr.mxu0 0.0
    %1175 = vmatpush2.msra.mxu0 %v1076
    %1176 = vmatprep.subr.mxu0 0.0
    %1177 = vmatpush2.msra.mxu0 %v1075
    %1178 = vmatprep.mubr.f32.mxu0 %v1019
    %1179 = vmatmul.mubr.f32.gmra.mxu0 %v1039
    %v1180 = vpop.f32.mrf.mxu0
    %v1181 = vadd.f32 %v1112, %v1180
    %v1182 = vpop.f32.mrf.mxu0
    %1183 = vmatprep.mubr.f32.mxu0 %v1020
    %1184 = vmatmul.mubr.f32.gmra.mxu0 %v1040
    %v1185 = vpop.f32.mrf.mxu0
    %v1186 = vadd.f32 %v1112, %v1185
    %v1187 = vpop.f32.mrf.mxu0
    %1188 = vmatprep.mubr.f32.mxu0 %v1021
    %1189 = vmatmul.mubr.f32.gmra.mxu0 %v1041
    %v1190 = vpop.f32.mrf.mxu0
    %v1191 = vadd.f32 %v1112, %v1190
    %v1192 = vpop.f32.mrf.mxu0
    %1193 = vmatprep.mubr.f32.mxu0 %v1022
    %1194 = vmatmul.mubr.f32.gmra.mxu0 %v1042
    %v1195 = vpop.f32.mrf.mxu0
    %v1196 = vadd.f32 %v1112, %v1195
    %v1197 = vpop.f32.mrf.mxu0
    %1198 = vdwg.mxu0
    %1199 = vmatprep.subr.mxu0 0.0
    %1200 = vmatpush1.msra.mxu0 %v1106
    %1201 = vmatprep.subr.mxu0 0.0
    %1202 = vmatpush1.msra.mxu0 %v1105
    %1203 = vmatprep.subr.mxu0 0.0
    %1204 = vmatpush1.msra.mxu0 %v1104
    %1205 = vmatprep.subr.mxu0 0.0
    %1206 = vmatpush1.msra.mxu0 %v1103
    %1207 = vmatprep.subr.mxu0 0.0
    %1208 = vmatpush1.msra.mxu0 %v1102
    %1209 = vmatprep.subr.mxu0 0.0
    %1210 = vmatpush1.msra.mxu0 %v1101
    %1211 = vmatprep.subr.mxu0 0.0
    %1212 = vmatpush1.msra.mxu0 %v1100
    %1213 = vmatprep.subr.mxu0 0.0
    %1214 = vmatpush1.msra.mxu0 %v1099
    %1215 = vmatprep.subr.mxu0 0.0
    %1216 = vmatpush1.msra.mxu0 %v1098
    %1217 = vmatprep.subr.mxu0 0.0
    %1218 = vmatpush1.msra.mxu0 %v1097
    %1219 = vmatprep.subr.mxu0 0.0
    %1220 = vmatpush1.msra.mxu0 %v1096
    %1221 = vmatprep.subr.mxu0 0.0
    %1222 = vmatpush1.msra.mxu0 %v1095
    %1223 = vmatprep.subr.mxu0 0.0
    %1224 = vmatpush1.msra.mxu0 %v1094
    %1225 = vmatprep.subr.mxu0 0.0
    %1226 = vmatpush1.msra.mxu0 %v1093
    %1227 = vmatprep.subr.mxu0 0.0
    %1228 = vmatpush1.msra.mxu0 %v1092
    %1229 = vmatprep.subr.mxu0 0.0
    %1230 = vmatpush1.msra.mxu0 %v1091
    %1231 = vmatprep.subr.mxu0 0.0
    %1232 = vmatpush2.msra.mxu0 0.0
    %1233 = vmatprep.subr.mxu0 0.0
    %1234 = vmatpush2.msra.mxu0 0.0
    %1235 = vmatprep.subr.mxu0 0.0
    %1236 = vmatpush2.msra.mxu0 0.0
    %1237 = vmatprep.subr.mxu0 0.0
    %1238 = vmatpush2.msra.mxu0 0.0
    %1239 = vmatprep.subr.mxu0 0.0
    %1240 = vmatpush2.msra.mxu0 0.0
    %1241 = vmatprep.subr.mxu0 0.0
    %1242 = vmatpush2.msra.mxu0 0.0
    %1243 = vmatprep.subr.mxu0 0.0
    %1244 = vmatpush2.msra.mxu0 0.0
    %1245 = vmatprep.subr.mxu0 0.0
    %1246 = vmatpush2.msra.mxu0 0.0
    %1247 = vmatprep.subr.mxu0 0.0
    %1248 = vmatpush2.msra.mxu0 0.0
    %1249 = vmatprep.subr.mxu0 0.0
    %1250 = vmatpush2.msra.mxu0 0.0
    %1251 = vmatprep.subr.mxu0 0.0
    %1252 = vmatpush2.msra.mxu0 0.0
    %1253 = vmatprep.subr.mxu0 0.0
    %1254 = vmatpush2.msra.mxu0 0.0
    %1255 = vmatprep.subr.mxu0 0.0
    %1256 = vmatpush2.msra.mxu0 0.0
    %1257 = vmatprep.subr.mxu0 0.0
    %1258 = vmatpush2.msra.mxu0 0.0
    %1259 = vmatprep.subr.mxu0 0.0
    %1260 = vmatpush2.msra.mxu0 0.0
    %1261 = vmatprep.subr.mxu0 0.0
    %1262 = vmatpush2.msra.mxu0 0.0
    %1263 = vmatprep.mubr.f32.mxu0 0.0
    %1264 = vmatmul.mubr.f32.gmra.mxu0 %v1055
    %v1265 = vpop.f32.mrf.mxu0
    %v1266 = vadd.f32 %v1181, %v1265
    %v1267 = vpop.f32.mrf.mxu0
    %1268 = vmatprep.mubr.f32.mxu0 0.0
    %1269 = vmatmul.mubr.f32.gmra.mxu0 %v1056
    %v1270 = vpop.f32.mrf.mxu0
    %v1271 = vadd.f32 %v1186, %v1270
    %v1272 = vpop.f32.mrf.mxu0
    %1273 = vmatprep.mubr.f32.mxu0 0.0
    %1274 = vmatmul.mubr.f32.gmra.mxu0 %v1057
    %v1275 = vpop.f32.mrf.mxu0
    %v1276 = vadd.f32 %v1191, %v1275
    %v1277 = vpop.f32.mrf.mxu0
    %1278 = vmatprep.mubr.f32.mxu0 0.0
    %1279 = vmatmul.mubr.f32.gmra.mxu0 %v1058
    %v1280 = vpop.f32.mrf.mxu0
    %v1281 = vadd.f32 %v1196, %v1280
    %v1282 = vpop.f32.mrf.mxu0
    %1283 = vdwg.mxu0
    %v1284 = vadd.f32 %v496, %v1266
    %v1285 = vadd.f32 %v497, %v1271
    %v1286 = vadd.f32 %v498, %v1276
    %v1287 = vadd.f32 %v499, %v1281
    %v1288 = vmax.f32 %v1284, 0.0
    %v1289 = vmax.f32 %v1285, 0.0
    %v1290 = vmax.f32 %v1286, 0.0
    %v1291 = vmax.f32 %v1287, 0.0
    %v1296 = vrot.slane %v1288, 7
    %v1297 = vrot.slane %v1289, 7
    %v1298 = vsel %vm237, %v1296, %v1297
    %v1299 = vrot.slane %v1290, 7
    %v1300 = vsel %vm237, %v1297, %v1299
    %v1301 = vrot.slane %v1291, 7
    %v1302 = vsel %vm237, %v1299, %v1301
    %v1307 = vsel %vm237, 0.0, %v1296
    %v1308 = vsel %vm207, 0.0, %v1307
    %v1309 = vsel %vm208, 0.0, %v1298
    %v1310 = vsel %vm209, 0.0, %v1300
    %v1311 = vsel %vm210, 0.0, %v1302
    %v1312 = vrot.slane %v1288, 1
    %v1313 = vrot.slane %v1289, 1
    %v1314 = vsel %vm254, %v1312, %v1313
    %v1315 = vrot.slane %v1290, 1
    %v1316 = vsel %vm254, %v1313, %v1315
    %v1317 = vrot.slane %v1291, 1
    %v1318 = vsel %vm254, %v1315, %v1317
    %v1323 = vsel %vm254, %v1317, 0.0
    %v1324 = vsel %vm211, 0.0, %v1314
    %v1325 = vsel %vm212, 0.0, %v1316
    %v1326 = vsel %vm213, 0.0, %v1318
    %v1327 = vsel %vm214, 0.0, %v1323
    %v1328 = vld [vmem:[#allocation13] sm:$0xff]
    %v1329 = vld [vmem:[#allocation13 + $0x8] sm:$0xff]
    %v1330 = vld [vmem:[#allocation13 + $0x10] sm:$0xff]
    %v1331 = vld [vmem:[#allocation13 + $0x18] sm:$0xff]
    %v1332 = vld [vmem:[#allocation13 + $0x20] sm:$0xff]
    %v1333 = vld [vmem:[#allocation13 + $0x28] sm:$0xff]
    %v1334 = vld [vmem:[#allocation13 + $0x30] sm:$0xff]
    %v1335 = vld [vmem:[#allocation13 + $0x38] sm:$0xff]
    %v1336 = vld [vmem:[#allocation13 + $0x40] sm:$0xff]
    %v1337 = vld [vmem:[#allocation13 + $0x48] sm:$0xff]
    %v1338 = vld [vmem:[#allocation13 + $0x50] sm:$0xff]
    %v1339 = vld [vmem:[#allocation13 + $0x58] sm:$0xff]
    %v1340 = vld [vmem:[#allocation13 + $0x60] sm:$0xff]
    %v1341 = vld [vmem:[#allocation13 + $0x68] sm:$0xff]
    %v1342 = vld [vmem:[#allocation13 + $0x70] sm:$0xff]
    %v1343 = vld [vmem:[#allocation13 + $0x78] sm:$0xff]
    %v1344 = vld [vmem:[#allocation13 + $0x80] sm:$0xff]
    %v1345 = vld [vmem:[#allocation13 + $0x88] sm:$0xff]
    %v1346 = vld [vmem:[#allocation13 + $0x90] sm:$0xff]
    %v1347 = vld [vmem:[#allocation13 + $0x98] sm:$0xff]
    %v1348 = vld [vmem:[#allocation13 + $0xa0] sm:$0xff]
    %v1349 = vld [vmem:[#allocation13 + $0xa8] sm:$0xff]
    %v1350 = vld [vmem:[#allocation13 + $0xb0] sm:$0xff]
    %v1351 = vld [vmem:[#allocation13 + $0xb8] sm:$0xff]
    %v1352 = vld [vmem:[#allocation13 + $0xc0] sm:$0xff]
    %v1353 = vld [vmem:[#allocation13 + $0xc8] sm:$0xff]
    %v1354 = vld [vmem:[#allocation13 + $0xd0] sm:$0xff]
    %v1355 = vld [vmem:[#allocation13 + $0xd8] sm:$0xff]
    %v1356 = vld [vmem:[#allocation13 + $0xe0] sm:$0xff]
    %v1357 = vld [vmem:[#allocation13 + $0xe8] sm:$0xff]
    %v1358 = vld [vmem:[#allocation13 + $0xf0] sm:$0xff]
    %v1359 = vld [vmem:[#allocation13 + $0xf8] sm:$0xff]
    %v1360 = vld [vmem:[#allocation13 + $0x100] sm:$0xff]
    %v1361 = vld [vmem:[#allocation13 + $0x108] sm:$0xff]
    %v1362 = vld [vmem:[#allocation13 + $0x110] sm:$0xff]
    %v1363 = vld [vmem:[#allocation13 + $0x118] sm:$0xff]
    %v1364 = vld [vmem:[#allocation13 + $0x120] sm:$0xff]
    %v1365 = vld [vmem:[#allocation13 + $0x128] sm:$0xff]
    %v1366 = vld [vmem:[#allocation13 + $0x130] sm:$0xff]
    %v1367 = vld [vmem:[#allocation13 + $0x138] sm:$0xff]
    %v1368 = vld [vmem:[#allocation13 + $0x140] sm:$0xff]
    %v1369 = vld [vmem:[#allocation13 + $0x148] sm:$0xff]
    %v1370 = vld [vmem:[#allocation13 + $0x150] sm:$0xff]
    %v1371 = vld [vmem:[#allocation13 + $0x158] sm:$0xff]
    %v1372 = vld [vmem:[#allocation13 + $0x160] sm:$0xff]
    %v1373 = vld [vmem:[#allocation13 + $0x168] sm:$0xff]
    %v1374 = vld [vmem:[#allocation13 + $0x170] sm:$0xff]
    %v1375 = vld [vmem:[#allocation13 + $0x178] sm:$0xff]
    %v1376 = vld [vmem:[%s10] sm:$0x1]
    %v1378 = vlaneseq
    %v1379 = vshrl.u32 %v1378, 7
    %v1380 = vsub.s32 0, %v1379
    %v1381 = vrot.slane %v1376, %v1380
    %1383 = vmatprep.subr.mxu0 0.0
    %1384 = vmatpush1.msra.mxu0 %v1343
    %1385 = vmatprep.subr.mxu0 0.0
    %1386 = vmatpush1.msra.mxu0 %v1342
    %1387 = vmatprep.subr.mxu0 0.0
    %1388 = vmatpush1.msra.mxu0 %v1341
    %1389 = vmatprep.subr.mxu0 0.0
    %1390 = vmatpush1.msra.mxu0 %v1340
    %1391 = vmatprep.subr.mxu0 0.0
    %1392 = vmatpush1.msra.mxu0 %v1339
    %1393 = vmatprep.subr.mxu0 0.0
    %1394 = vmatpush1.msra.mxu0 %v1338
    %1395 = vmatprep.subr.mxu0 0.0
    %1396 = vmatpush1.msra.mxu0 %v1337
    %1397 = vmatprep.subr.mxu0 0.0
    %1398 = vmatpush1.msra.mxu0 %v1336
    %1399 = vmatprep.subr.mxu0 0.0
    %1400 = vmatpush1.msra.mxu0 %v1335
    %1401 = vmatprep.subr.mxu0 0.0
    %1402 = vmatpush1.msra.mxu0 %v1334
    %1403 = vmatprep.subr.mxu0 0.0
    %1404 = vmatpush1.msra.mxu0 %v1333
    %1405 = vmatprep.subr.mxu0 0.0
    %1406 = vmatpush1.msra.mxu0 %v1332
    %1407 = vmatprep.subr.mxu0 0.0
    %1408 = vmatpush1.msra.mxu0 %v1331
    %1409 = vmatprep.subr.mxu0 0.0
    %1410 = vmatpush1.msra.mxu0 %v1330
    %1411 = vmatprep.subr.mxu0 0.0
    %1412 = vmatpush1.msra.mxu0 %v1329
    %1413 = vmatprep.subr.mxu0 0.0
    %1414 = vmatpush1.msra.mxu0 %v1328
    %1415 = vmatprep.subr.mxu0 0.0
    %1416 = vmatpush2.msra.mxu0 %v1359
    %1417 = vmatprep.subr.mxu0 0.0
    %1418 = vmatpush2.msra.mxu0 %v1358
    %1419 = vmatprep.subr.mxu0 0.0
    %1420 = vmatpush2.msra.mxu0 %v1357
    %1421 = vmatprep.subr.mxu0 0.0
    %1422 = vmatpush2.msra.mxu0 %v1356
    %1423 = vmatprep.subr.mxu0 0.0
    %1424 = vmatpush2.msra.mxu0 %v1355
    %1425 = vmatprep.subr.mxu0 0.0
    %1426 = vmatpush2.msra.mxu0 %v1354
    %1427 = vmatprep.subr.mxu0 0.0
    %1428 = vmatpush2.msra.mxu0 %v1353
    %1429 = vmatprep.subr.mxu0 0.0
    %1430 = vmatpush2.msra.mxu0 %v1352
    %1431 = vmatprep.subr.mxu0 0.0
    %1432 = vmatpush2.msra.mxu0 %v1351
    %1433 = vmatprep.subr.mxu0 0.0
    %1434 = vmatpush2.msra.mxu0 %v1350
    %1435 = vmatprep.subr.mxu0 0.0
    %1436 = vmatpush2.msra.mxu0 %v1349
    %1437 = vmatprep.subr.mxu0 0.0
    %1438 = vmatpush2.msra.mxu0 %v1348
    %1439 = vmatprep.subr.mxu0 0.0
    %1440 = vmatpush2.msra.mxu0 %v1347
    %1441 = vmatprep.subr.mxu0 0.0
    %1442 = vmatpush2.msra.mxu0 %v1346
    %1443 = vmatprep.subr.mxu0 0.0
    %1444 = vmatpush2.msra.mxu0 %v1345
    %1445 = vmatprep.subr.mxu0 0.0
    %1446 = vmatpush2.msra.mxu0 %v1344
    %1447 = vmatprep.mubr.f32.mxu0 %v1288
    %1448 = vmatmul.mubr.f32.gmra.mxu0 %v1308
    %v1449 = vpop.f32.mrf.mxu0
    %v1450 = vadd.f32 %v1381, %v1449
    %v1451 = vpop.f32.mrf.mxu0
    %1452 = vmatprep.mubr.f32.mxu0 %v1289
    %1453 = vmatmul.mubr.f32.gmra.mxu0 %v1309
    %v1454 = vpop.f32.mrf.mxu0
    %v1455 = vadd.f32 %v1381, %v1454
    %v1456 = vpop.f32.mrf.mxu0
    %1457 = vmatprep.mubr.f32.mxu0 %v1290
    %1458 = vmatmul.mubr.f32.gmra.mxu0 %v1310
    %v1459 = vpop.f32.mrf.mxu0
    %v1460 = vadd.f32 %v1381, %v1459
    %v1461 = vpop.f32.mrf.mxu0
    %1462 = vmatprep.mubr.f32.mxu0 %v1291
    %1463 = vmatmul.mubr.f32.gmra.mxu0 %v1311
    %v1464 = vpop.f32.mrf.mxu0
    %v1465 = vadd.f32 %v1381, %v1464
    %v1466 = vpop.f32.mrf.mxu0
    %1467 = vdwg.mxu0
    %1468 = vmatprep.subr.mxu0 0.0
    %1469 = vmatpush1.msra.mxu0 %v1375
    %1470 = vmatprep.subr.mxu0 0.0
    %1471 = vmatpush1.msra.mxu0 %v1374
    %1472 = vmatprep.subr.mxu0 0.0
    %1473 = vmatpush1.msra.mxu0 %v1373
    %1474 = vmatprep.subr.mxu0 0.0
    %1475 = vmatpush1.msra.mxu0 %v1372
    %1476 = vmatprep.subr.mxu0 0.0
    %1477 = vmatpush1.msra.mxu0 %v1371
    %1478 = vmatprep.subr.mxu0 0.0
    %1479 = vmatpush1.msra.mxu0 %v1370
    %1480 = vmatprep.subr.mxu0 0.0
    %1481 = vmatpush1.msra.mxu0 %v1369
    %1482 = vmatprep.subr.mxu0 0.0
    %1483 = vmatpush1.msra.mxu0 %v1368
    %1484 = vmatprep.subr.mxu0 0.0
    %1485 = vmatpush1.msra.mxu0 %v1367
    %1486 = vmatprep.subr.mxu0 0.0
    %1487 = vmatpush1.msra.mxu0 %v1366
    %1488 = vmatprep.subr.mxu0 0.0
    %1489 = vmatpush1.msra.mxu0 %v1365
    %1490 = vmatprep.subr.mxu0 0.0
    %1491 = vmatpush1.msra.mxu0 %v1364
    %1492 = vmatprep.subr.mxu0 0.0
    %1493 = vmatpush1.msra.mxu0 %v1363
    %1494 = vmatprep.subr.mxu0 0.0
    %1495 = vmatpush1.msra.mxu0 %v1362
    %1496 = vmatprep.subr.mxu0 0.0
    %1497 = vmatpush1.msra.mxu0 %v1361
    %1498 = vmatprep.subr.mxu0 0.0
    %1499 = vmatpush1.msra.mxu0 %v1360
    %1500 = vmatprep.subr.mxu0 0.0
    %1501 = vmatpush2.msra.mxu0 0.0
    %1502 = vmatprep.subr.mxu0 0.0
    %1503 = vmatpush2.msra.mxu0 0.0
    %1504 = vmatprep.subr.mxu0 0.0
    %1505 = vmatpush2.msra.mxu0 0.0
    %1506 = vmatprep.subr.mxu0 0.0
    %1507 = vmatpush2.msra.mxu0 0.0
    %1508 = vmatprep.subr.mxu0 0.0
    %1509 = vmatpush2.msra.mxu0 0.0
    %1510 = vmatprep.subr.mxu0 0.0
    %1511 = vmatpush2.msra.mxu0 0.0
    %1512 = vmatprep.subr.mxu0 0.0
    %1513 = vmatpush2.msra.mxu0 0.0
    %1514 = vmatprep.subr.mxu0 0.0
    %1515 = vmatpush2.msra.mxu0 0.0
    %1516 = vmatprep.subr.mxu0 0.0
    %1517 = vmatpush2.msra.mxu0 0.0
    %1518 = vmatprep.subr.mxu0 0.0
    %1519 = vmatpush2.msra.mxu0 0.0
    %1520 = vmatprep.subr.mxu0 0.0
    %1521 = vmatpush2.msra.mxu0 0.0
    %1522 = vmatprep.subr.mxu0 0.0
    %1523 = vmatpush2.msra.mxu0 0.0
    %1524 = vmatprep.subr.mxu0 0.0
    %1525 = vmatpush2.msra.mxu0 0.0
    %1526 = vmatprep.subr.mxu0 0.0
    %1527 = vmatpush2.msra.mxu0 0.0
    %1528 = vmatprep.subr.mxu0 0.0
    %1529 = vmatpush2.msra.mxu0 0.0
    %1530 = vmatprep.subr.mxu0 0.0
    %1531 = vmatpush2.msra.mxu0 0.0
    %1532 = vmatprep.mubr.f32.mxu0 0.0
    %1533 = vmatmul.mubr.f32.gmra.mxu0 %v1324
    %v1534 = vpop.f32.mrf.mxu0
    %v1535 = vadd.f32 %v1450, %v1534
    %v1536 = vpop.f32.mrf.mxu0
    %1537 = vmatprep.mubr.f32.mxu0 0.0
    %1538 = vmatmul.mubr.f32.gmra.mxu0 %v1325
    %v1539 = vpop.f32.mrf.mxu0
    %v1540 = vadd.f32 %v1455, %v1539
    %v1541 = vpop.f32.mrf.mxu0
    %1542 = vmatprep.mubr.f32.mxu0 0.0
    %1543 = vmatmul.mubr.f32.gmra.mxu0 %v1326
    %v1544 = vpop.f32.mrf.mxu0
    %v1545 = vadd.f32 %v1460, %v1544
    %v1546 = vpop.f32.mrf.mxu0
    %1547 = vmatprep.mubr.f32.mxu0 0.0
    %1548 = vmatmul.mubr.f32.gmra.mxu0 %v1327
    %v1549 = vpop.f32.mrf.mxu0
    %v1550 = vadd.f32 %v1465, %v1549
    %v1551 = vpop.f32.mrf.mxu0
    %1552 = vdwg.mxu0
    %v1553 = vmax.f32 %v1535, 0.0
    %v1554 = vmax.f32 %v1540, 0.0
    %v1555 = vmax.f32 %v1545, 0.0
    %v1556 = vmax.f32 %v1550, 0.0
    %v1557 = vadd.f32 %v1288, %v1553
    %v1558 = vadd.f32 %v1289, %v1554
    %v1559 = vadd.f32 %v1290, %v1555
    %v1560 = vadd.f32 %v1291, %v1556
    %v1565 = vrot.slane %v1557, 7
    %v1566 = vrot.slane %v1558, 7
    %v1567 = vsel %vm237, %v1565, %v1566
    %v1568 = vrot.slane %v1559, 7
    %v1569 = vsel %vm237, %v1566, %v1568
    %v1570 = vrot.slane %v1560, 7
    %v1571 = vsel %vm237, %v1568, %v1570
    %v1576 = vsel %vm237, 0.0, %v1565
    %v1577 = vsel %vm207, 0.0, %v1576
    %v1578 = vsel %vm208, 0.0, %v1567
    %v1579 = vsel %vm209, 0.0, %v1569
    %v1580 = vsel %vm210, 0.0, %v1571
    %v1581 = vrot.slane %v1557, 1
    %v1582 = vrot.slane %v1558, 1
    %v1583 = vsel %vm254, %v1581, %v1582
    %v1584 = vrot.slane %v1559, 1
    %v1585 = vsel %vm254, %v1582, %v1584
    %v1586 = vrot.slane %v1560, 1
    %v1587 = vsel %vm254, %v1584, %v1586
    %v1592 = vsel %vm254, %v1586, 0.0
    %v1593 = vsel %vm211, 0.0, %v1583
    %v1594 = vsel %vm212, 0.0, %v1585
    %v1595 = vsel %vm213, 0.0, %v1587
    %v1596 = vsel %vm214, 0.0, %v1592
    %v1597 = vld [vmem:[#allocation14] sm:$0xff]
    %v1598 = vld [vmem:[#allocation14 + $0x8] sm:$0xff]
    %v1599 = vld [vmem:[#allocation14 + $0x10] sm:$0xff]
    %v1600 = vld [vmem:[#allocation14 + $0x18] sm:$0xff]
    %v1601 = vld [vmem:[#allocation14 + $0x20] sm:$0xff]
    %v1602 = vld [vmem:[#allocation14 + $0x28] sm:$0xff]
    %v1603 = vld [vmem:[#allocation14 + $0x30] sm:$0xff]
    %v1604 = vld [vmem:[#allocation14 + $0x38] sm:$0xff]
    %v1605 = vld [vmem:[#allocation14 + $0x40] sm:$0xff]
    %v1606 = vld [vmem:[#allocation14 + $0x48] sm:$0xff]
    %v1607 = vld [vmem:[#allocation14 + $0x50] sm:$0xff]
    %v1608 = vld [vmem:[#allocation14 + $0x58] sm:$0xff]
    %v1609 = vld [vmem:[#allocation14 + $0x60] sm:$0xff]
    %v1610 = vld [vmem:[#allocation14 + $0x68] sm:$0xff]
    %v1611 = vld [vmem:[#allocation14 + $0x70] sm:$0xff]
    %v1612 = vld [vmem:[#allocation14 + $0x78] sm:$0xff]
    %v1613 = vld [vmem:[#allocation14 + $0x80] sm:$0xff]
    %v1614 = vld [vmem:[#allocation14 + $0x88] sm:$0xff]
    %v1615 = vld [vmem:[#allocation14 + $0x90] sm:$0xff]
    %v1616 = vld [vmem:[#allocation14 + $0x98] sm:$0xff]
    %v1617 = vld [vmem:[#allocation14 + $0xa0] sm:$0xff]
    %v1618 = vld [vmem:[#allocation14 + $0xa8] sm:$0xff]
    %v1619 = vld [vmem:[#allocation14 + $0xb0] sm:$0xff]
    %v1620 = vld [vmem:[#allocation14 + $0xb8] sm:$0xff]
    %v1621 = vld [vmem:[#allocation14 + $0xc0] sm:$0xff]
    %v1622 = vld [vmem:[#allocation14 + $0xc8] sm:$0xff]
    %v1623 = vld [vmem:[#allocation14 + $0xd0] sm:$0xff]
    %v1624 = vld [vmem:[#allocation14 + $0xd8] sm:$0xff]
    %v1625 = vld [vmem:[#allocation14 + $0xe0] sm:$0xff]
    %v1626 = vld [vmem:[#allocation14 + $0xe8] sm:$0xff]
    %v1627 = vld [vmem:[#allocation14 + $0xf0] sm:$0xff]
    %v1628 = vld [vmem:[#allocation14 + $0xf8] sm:$0xff]
    %v1629 = vld [vmem:[#allocation14 + $0x100] sm:$0xff]
    %v1630 = vld [vmem:[#allocation14 + $0x108] sm:$0xff]
    %v1631 = vld [vmem:[#allocation14 + $0x110] sm:$0xff]
    %v1632 = vld [vmem:[#allocation14 + $0x118] sm:$0xff]
    %v1633 = vld [vmem:[#allocation14 + $0x120] sm:$0xff]
    %v1634 = vld [vmem:[#allocation14 + $0x128] sm:$0xff]
    %v1635 = vld [vmem:[#allocation14 + $0x130] sm:$0xff]
    %v1636 = vld [vmem:[#allocation14 + $0x138] sm:$0xff]
    %v1637 = vld [vmem:[#allocation14 + $0x140] sm:$0xff]
    %v1638 = vld [vmem:[#allocation14 + $0x148] sm:$0xff]
    %v1639 = vld [vmem:[#allocation14 + $0x150] sm:$0xff]
    %v1640 = vld [vmem:[#allocation14 + $0x158] sm:$0xff]
    %v1641 = vld [vmem:[#allocation14 + $0x160] sm:$0xff]
    %v1642 = vld [vmem:[#allocation14 + $0x168] sm:$0xff]
    %v1643 = vld [vmem:[#allocation14 + $0x170] sm:$0xff]
    %v1644 = vld [vmem:[#allocation14 + $0x178] sm:$0xff]
    %v1645 = vld [vmem:[%s12] sm:$0x1]
    %v1647 = vlaneseq
    %v1648 = vshrl.u32 %v1647, 7
    %v1649 = vsub.s32 0, %v1648
    %v1650 = vrot.slane %v1645, %v1649
    %1652 = vmatprep.subr.mxu0 0.0
    %1653 = vmatpush1.msra.mxu0 %v1612
    %1654 = vmatprep.subr.mxu0 0.0
    %1655 = vmatpush1.msra.mxu0 %v1611
    %1656 = vmatprep.subr.mxu0 0.0
    %1657 = vmatpush1.msra.mxu0 %v1610
    %1658 = vmatprep.subr.mxu0 0.0
    %1659 = vmatpush1.msra.mxu0 %v1609
    %1660 = vmatprep.subr.mxu0 0.0
    %1661 = vmatpush1.msra.mxu0 %v1608
    %1662 = vmatprep.subr.mxu0 0.0
    %1663 = vmatpush1.msra.mxu0 %v1607
    %1664 = vmatprep.subr.mxu0 0.0
    %1665 = vmatpush1.msra.mxu0 %v1606
    %1666 = vmatprep.subr.mxu0 0.0
    %1667 = vmatpush1.msra.mxu0 %v1605
    %1668 = vmatprep.subr.mxu0 0.0
    %1669 = vmatpush1.msra.mxu0 %v1604
    %1670 = vmatprep.subr.mxu0 0.0
    %1671 = vmatpush1.msra.mxu0 %v1603
    %1672 = vmatprep.subr.mxu0 0.0
    %1673 = vmatpush1.msra.mxu0 %v1602
    %1674 = vmatprep.subr.mxu0 0.0
    %1675 = vmatpush1.msra.mxu0 %v1601
    %1676 = vmatprep.subr.mxu0 0.0
    %1677 = vmatpush1.msra.mxu0 %v1600
    %1678 = vmatprep.subr.mxu0 0.0
    %1679 = vmatpush1.msra.mxu0 %v1599
    %1680 = vmatprep.subr.mxu0 0.0
    %1681 = vmatpush1.msra.mxu0 %v1598
    %1682 = vmatprep.subr.mxu0 0.0
    %1683 = vmatpush1.msra.mxu0 %v1597
    %1684 = vmatprep.subr.mxu0 0.0
    %1685 = vmatpush2.msra.mxu0 %v1628
    %1686 = vmatprep.subr.mxu0 0.0
    %1687 = vmatpush2.msra.mxu0 %v1627
    %1688 = vmatprep.subr.mxu0 0.0
    %1689 = vmatpush2.msra.mxu0 %v1626
    %1690 = vmatprep.subr.mxu0 0.0
    %1691 = vmatpush2.msra.mxu0 %v1625
    %1692 = vmatprep.subr.mxu0 0.0
    %1693 = vmatpush2.msra.mxu0 %v1624
    %1694 = vmatprep.subr.mxu0 0.0
    %1695 = vmatpush2.msra.mxu0 %v1623
    %1696 = vmatprep.subr.mxu0 0.0
    %1697 = vmatpush2.msra.mxu0 %v1622
    %1698 = vmatprep.subr.mxu0 0.0
    %1699 = vmatpush2.msra.mxu0 %v1621
    %1700 = vmatprep.subr.mxu0 0.0
    %1701 = vmatpush2.msra.mxu0 %v1620
    %1702 = vmatprep.subr.mxu0 0.0
    %1703 = vmatpush2.msra.mxu0 %v1619
    %1704 = vmatprep.subr.mxu0 0.0
    %1705 = vmatpush2.msra.mxu0 %v1618
    %1706 = vmatprep.subr.mxu0 0.0
    %1707 = vmatpush2.msra.mxu0 %v1617
    %1708 = vmatprep.subr.mxu0 0.0
    %1709 = vmatpush2.msra.mxu0 %v1616
    %1710 = vmatprep.subr.mxu0 0.0
    %1711 = vmatpush2.msra.mxu0 %v1615
    %1712 = vmatprep.subr.mxu0 0.0
    %1713 = vmatpush2.msra.mxu0 %v1614
    %1714 = vmatprep.subr.mxu0 0.0
    %1715 = vmatpush2.msra.mxu0 %v1613
    %1716 = vmatprep.mubr.f32.mxu0 %v1557
    %1717 = vmatmul.mubr.f32.gmra.mxu0 %v1577
    %v1718 = vpop.f32.mrf.mxu0
    %v1719 = vadd.f32 %v1650, %v1718
    %v1720 = vpop.f32.mrf.mxu0
    %1721 = vmatprep.mubr.f32.mxu0 %v1558
    %1722 = vmatmul.mubr.f32.gmra.mxu0 %v1578
    %v1723 = vpop.f32.mrf.mxu0
    %v1724 = vadd.f32 %v1650, %v1723
    %v1725 = vpop.f32.mrf.mxu0
    %1726 = vmatprep.mubr.f32.mxu0 %v1559
    %1727 = vmatmul.mubr.f32.gmra.mxu0 %v1579
    %v1728 = vpop.f32.mrf.mxu0
    %v1729 = vadd.f32 %v1650, %v1728
    %v1730 = vpop.f32.mrf.mxu0
    %1731 = vmatprep.mubr.f32.mxu0 %v1560
    %1732 = vmatmul.mubr.f32.gmra.mxu0 %v1580
    %v1733 = vpop.f32.mrf.mxu0
    %v1734 = vadd.f32 %v1650, %v1733
    %v1735 = vpop.f32.mrf.mxu0
    %1736 = vdwg.mxu0
    %1737 = vmatprep.subr.mxu0 0.0
    %1738 = vmatpush1.msra.mxu0 %v1644
    %1739 = vmatprep.subr.mxu0 0.0
    %1740 = vmatpush1.msra.mxu0 %v1643
    %1741 = vmatprep.subr.mxu0 0.0
    %1742 = vmatpush1.msra.mxu0 %v1642
    %1743 = vmatprep.subr.mxu0 0.0
    %1744 = vmatpush1.msra.mxu0 %v1641
    %1745 = vmatprep.subr.mxu0 0.0
    %1746 = vmatpush1.msra.mxu0 %v1640
    %1747 = vmatprep.subr.mxu0 0.0
    %1748 = vmatpush1.msra.mxu0 %v1639
    %1749 = vmatprep.subr.mxu0 0.0
    %1750 = vmatpush1.msra.mxu0 %v1638
    %1751 = vmatprep.subr.mxu0 0.0
    %1752 = vmatpush1.msra.mxu0 %v1637
    %1753 = vmatprep.subr.mxu0 0.0
    %1754 = vmatpush1.msra.mxu0 %v1636
    %1755 = vmatprep.subr.mxu0 0.0
    %1756 = vmatpush1.msra.mxu0 %v1635
    %1757 = vmatprep.subr.mxu0 0.0
    %1758 = vmatpush1.msra.mxu0 %v1634
    %1759 = vmatprep.subr.mxu0 0.0
    %1760 = vmatpush1.msra.mxu0 %v1633
    %1761 = vmatprep.subr.mxu0 0.0
    %1762 = vmatpush1.msra.mxu0 %v1632
    %1763 = vmatprep.subr.mxu0 0.0
    %1764 = vmatpush1.msra.mxu0 %v1631
    %1765 = vmatprep.subr.mxu0 0.0
    %1766 = vmatpush1.msra.mxu0 %v1630
    %1767 = vmatprep.subr.mxu0 0.0
    %1768 = vmatpush1.msra.mxu0 %v1629
    %1769 = vmatprep.subr.mxu0 0.0
    %1770 = vmatpush2.msra.mxu0 0.0
    %1771 = vmatprep.subr.mxu0 0.0
    %1772 = vmatpush2.msra.mxu0 0.0
    %1773 = vmatprep.subr.mxu0 0.0
    %1774 = vmatpush2.msra.mxu0 0.0
    %1775 = vmatprep.subr.mxu0 0.0
    %1776 = vmatpush2.msra.mxu0 0.0
    %1777 = vmatprep.subr.mxu0 0.0
    %1778 = vmatpush2.msra.mxu0 0.0
    %1779 = vmatprep.subr.mxu0 0.0
    %1780 = vmatpush2.msra.mxu0 0.0
    %1781 = vmatprep.subr.mxu0 0.0
    %1782 = vmatpush2.msra.mxu0 0.0
    %1783 = vmatprep.subr.mxu0 0.0
    %1784 = vmatpush2.msra.mxu0 0.0
    %1785 = vmatprep.subr.mxu0 0.0
    %1786 = vmatpush2.msra.mxu0 0.0
    %1787 = vmatprep.subr.mxu0 0.0
    %1788 = vmatpush2.msra.mxu0 0.0
    %1789 = vmatprep.subr.mxu0 0.0
    %1790 = vmatpush2.msra.mxu0 0.0
    %1791 = vmatprep.subr.mxu0 0.0
    %1792 = vmatpush2.msra.mxu0 0.0
    %1793 = vmatprep.subr.mxu0 0.0
    %1794 = vmatpush2.msra.mxu0 0.0
    %1795 = vmatprep.subr.mxu0 0.0
    %1796 = vmatpush2.msra.mxu0 0.0
    %1797 = vmatprep.subr.mxu0 0.0
    %1798 = vmatpush2.msra.mxu0 0.0
    %1799 = vmatprep.subr.mxu0 0.0
    %1800 = vmatpush2.msra.mxu0 0.0
    %1801 = vmatprep.mubr.f32.mxu0 0.0
    %1802 = vmatmul.mubr.f32.gmra.mxu0 %v1593
    %v1803 = vpop.f32.mrf.mxu0
    %v1804 = vadd.f32 %v1719, %v1803
    %v1805 = vpop.f32.mrf.mxu0
    %1806 = vmatprep.mubr.f32.mxu0 0.0
    %1807 = vmatmul.mubr.f32.gmra.mxu0 %v1594
    %v1808 = vpop.f32.mrf.mxu0
    %v1809 = vadd.f32 %v1724, %v1808
    %v1810 = vpop.f32.mrf.mxu0
    %1811 = vmatprep.mubr.f32.mxu0 0.0
    %1812 = vmatmul.mubr.f32.gmra.mxu0 %v1595
    %v1813 = vpop.f32.mrf.mxu0
    %v1814 = vadd.f32 %v1729, %v1813
    %v1815 = vpop.f32.mrf.mxu0
    %1816 = vmatprep.mubr.f32.mxu0 0.0
    %1817 = vmatmul.mubr.f32.gmra.mxu0 %v1596
    %v1818 = vpop.f32.mrf.mxu0
    %v1819 = vadd.f32 %v1734, %v1818
    %v1820 = vpop.f32.mrf.mxu0
    %1821 = vdwg.mxu0
    %v1822 = vmax.f32 %v1804, 0.0
    %v1823 = vmax.f32 %v1809, 0.0
    %v1824 = vmax.f32 %v1814, 0.0
    %v1825 = vmax.f32 %v1819, 0.0
    %1826 = vst [vmem:[#allocation16] sm:$0xff] %v1822
    %1827 = vst [vmem:[#allocation16 + $0x8] sm:$0xff] %v1823
    %1828 = vst [vmem:[#allocation16 + $0x10] sm:$0xff] %v1824
    %1829 = vst [vmem:[#allocation16 + $0x18] sm:$0xff] %v1825
    // Predicated region
    $region86: #{tpu_custom_call.1} parent=1 // pred_check
      _
    $region87: #{tpu_custom_call.1} parent=1 // pred_check_branch
      %1831 = sbr.rel (0) target = $region89
    $region88: #{tpu_custom_call.1} parent=1 // pred_region
      %s1833 = ssub.s32 512, 512
      %1834 = vsyncadd [#allocation4], %s1833
      %s1835 = sshll.u32 [#allocation16], 4
      %s1836 = int_to_ptr.vmem [resolvable:$true] %s1835
      %1841 = dma.vmem_to_hbm [thread:$0]  %s1836, 512, %s13, [#allocation4], 128, 128, 8
    $region89: #{tpu_custom_call.1} parent=1 // pred_fallthru
      _
    // Predicated region
    $region90: #{tpu_custom_call.1} parent=1 // pred_check
      _
    $region91: #{tpu_custom_call.1} parent=1 // pred_check_branch
      %1843 = sbr.rel (0) target = $region93
    $region92: #{tpu_custom_call.1} parent=1 // pred_region
      %1844 = dma.done [#allocation4], 512
    $region93: #{tpu_custom_call.1} parent=1 // pred_fallthru
      _
    %1845 = vsyncpa [#allocation3], 1
    %1846 = vsyncpa [#allocation6], 1
    %1847 = vsyncpa [#allocation9], 1
    %1848 = vsyncpa [#allocation12], 1
    %1849 = vsyncpa [#allocation15], 1
    %1850 = vsyncpa [#allocation4], 1

</llo_original>
